<compile_context>
chip_gen: v7x
topology: tpu7x:2x2x1
jax: 0.10.0
libtpu: 0.0.40
codegen_flags: <defaults>
</compile_context>

<pallas_src>
import functools

import jax
import jax.numpy as jnp
from jax import lax
from jax.experimental import pallas as pl
from jax.experimental.pallas import tpu as pltpu


def _cross_attn_kernel(q_ref, k_ref, v_ref,
                       wq_ref, wk_ref, wv_ref, wo_ref, bo_ref,
                       o_ref, *, num_heads, head_dim, compute_dtype):
    cd = compute_dtype
    f32 = jnp.float32

    # Weights are pre-cast (and Wq pre-scaled) in the wrapper -> plain loads.
    wq = wq_ref[...]                      # (inner, D)
    wk = wk_ref[...]                      # (inner, C)
    wv = wv_ref[...]                      # (inner, C)
    wo = wo_ref[...]                      # (D, inner)

    tb, _, nq = q_ref.shape
    d_out = o_ref.shape[1]

    # Hoisted once per grid step: bias broadcast + per-head output-proj slices.
    bias_b = jnp.broadcast_to(bo_ref[...], (d_out, nq))                  # (D, nq) f32
    wo_heads = [wo[:, h * head_dim:(h + 1) * head_dim]                   # (D, hd)
                for h in range(num_heads)]

    def batch_body(b, carry):
        xq = q_ref[b]                     # (D, nq)  channels x spatial (bf16)
        xk = k_ref[b]                     # (C, Nk)
        xv = v_ref[b]                     # (C, Nk)

        # Full-width projections: contract channels, spatial stays on lanes.
        q_all = jnp.dot(wq, xq, preferred_element_type=f32).astype(cd)   # (inner, nq)
        k_all = jnp.dot(wk, xk, preferred_element_type=f32).astype(cd)   # (inner, Nk)
        v_all = jnp.dot(wv, xv, preferred_element_type=f32).astype(cd)   # (inner, Nk)

        # Fused output projection: f32 accumulator initialized with the bias.
        y = bias_b
        for h in range(num_heads):                      # static unroll (few heads)
            s0 = h * head_dim
            qh = q_all[s0:s0 + head_dim, :]             # (hd, nq)
            kh = k_all[s0:s0 + head_dim, :]             # (hd, Nk)
            vh = v_all[s0:s0 + head_dim, :]             # (hd, Nk)

            # scores = Qh^T Kh: contract head_dim (dim 0 of both) on the MXU,
            # no materialized transpose.
            s = lax.dot_general(qh, kh, (((0,), (0,)), ((), ())),
                                preferred_element_type=f32)              # (nq, Nk)

            # Numerically-stable softmax in f32; divide via EUP reciprocal.
            m = jnp.max(s, axis=-1, keepdims=True)
            p = jnp.exp(s - m)
            denom = jnp.sum(p, axis=-1, keepdims=True)
            p = (p * pl.reciprocal(denom, approx=True)).astype(cd)

            # Head output kept feature-major: Vh @ P^T -> (hd, nq).
            oh = lax.dot_general(vh, p, (((1,), (1,)), ((), ())),
                                 preferred_element_type=f32).astype(cd)

            # Accumulate this head's contribution to the output projection.
            y = y + jnp.dot(wo_heads[h], oh, preferred_element_type=f32)  # (D, nq)

        o_ref[b] = y.astype(o_ref.dtype)
        return carry

    # Visible loop over the batch block bounds live ranges (no giant unroll).
    lax.fori_loop(0, tb, batch_body, 0, unroll=False)


def _pick_batch_block(bt, max_tb=4):
    # Small batch block (live ranges), but keep >=2 grid steps when possible so
    # the 'parallel' batch axis can shard across TensorCores (v7x megacore).
    divisors = [t for t in range(1, min(max_tb, bt) + 1) if bt % t == 0]
    preferred = [t for t in divisors if bt // t >= 2]
    return max(preferred) if preferred else max(divisors)


def _vmem_bytes_estimate(tb, d, c, nk, inner, head_dim, nq_tile, *,
                         in_bytes, out_bytes):
    """Rough per-grid-step VMEM footprint: pipelined blocks + live values."""
    dbl = 2                                               # double buffering
    blocks = dbl * tb * d * nq_tile * (in_bytes + out_bytes)        # q + out
    blocks += dbl * 2 * tb * c * nk * in_bytes                      # k + v
    weights = dbl * (2 * (inner * d + 2 * inner * c + d * inner) + 4 * d)
    live = 2 * (inner * nq_tile + 2 * inner * nk)                   # q/k/v_all bf16
    live += 4 * 2 * nq_tile * nk                                    # scores + probs f32
    live += 4 * d * nq_tile                                         # f32 accumulator
    live += 2 * head_dim * nq_tile                                  # per-head oh
    return blocks + weights + live


def _pick_nq_tile(nq, budget_bytes, est_fn):
    # Full block when small or not 128-aligned (demo path / odd BEV sizes);
    # else the largest 128-multiple tile (<=2048) dividing nq that fits budget.
    if nq % 128 != 0 or nq <= 2048:
        return nq
    for cand in (2048, 1024, 512, 256, 128):
        if nq % cand == 0 and est_fn(cand) <= budget_bytes:
            return cand
    return 128


def cross_attention(query, key, value, params, *, num_heads, head_dim,
                    batch_block=None, nq_block=None,
                    compute_dtype=jnp.bfloat16, out_dtype=None):
    """query: (B,T,D,H,W); key/value: (B,T,C,Hm,Wm). Returns (B,T,D,H,W).

    params use PyTorch nn.Linear layout (out_features, in_features):
      wq: (inner, D), wk/wv: (inner, C), wo: (D, inner), bo: (D,)
    with inner = num_heads * head_dim.
    """
    B, T, D, H, W = query.shape
    _, _, C, Hm, Wm = key.shape
    Nq, Nk = H * W, Hm * Wm
    BT = B * T
    inner = num_heads * head_dim
    out_dtype = query.dtype if out_dtype is None else out_dtype

    # Pure reshapes (no transposes); cast activations to bf16 ONCE here.
    q = query.reshape(BT, D, Nq).astype(compute_dtype)
    k = key.reshape(BT, C, Nk).astype(compute_dtype)
    v = value.reshape(BT, C, Nk).astype(compute_dtype)

    # Pre-scale Wq by 1/sqrt(head_dim) and pre-cast all weights to bf16 here.
    scale = float(head_dim) ** -0.5
    wq = (params["wq"] * scale).astype(compute_dtype)    # (inner, D)
    wk = params["wk"].astype(compute_dtype)              # (inner, C)
    wv = params["wv"].astype(compute_dtype)              # (inner, C)
    wo = params["wo"].astype(compute_dtype)              # (D, inner)
    bo = params["bo"].reshape(D, 1).astype(jnp.float32)  # (D, 1)

    tb = batch_block if batch_block is not None else _pick_batch_block(BT)
    assert BT % tb == 0, "batch_block must divide B*T"
    # TODO(synk): pad / add a remainder grid step so ragged B*T doesn't assert.

    # VMEM budget: v7x has 64 MiB physical vs 128 MiB on v5e/v6e.
    try:
        vmem_cap = int(pltpu.get_tpu_info().vmem_capacity_bytes)
    except Exception:
        vmem_cap = 64 * 1024 * 1024          # conservative (v7x) fallback
    budget = int(0.75 * vmem_cap)

    in_b = jnp.dtype(compute_dtype).itemsize
    out_b = jnp.dtype(out_dtype).itemsize
    est = functools.partial(_vmem_bytes_estimate, tb, D, C, Nk, inner, head_dim,
                            in_bytes=in_b, out_bytes=out_b)
    ntile = nq_block if nq_block is not None else _pick_nq_tile(Nq, budget, est)
    assert Nq % ntile == 0, "nq_block must divide H*W"
    vmem_limit = int(min(0.9 * vmem_cap, max(32 * 1024 * 1024, 2 * est(ntile))))

    kernel = functools.partial(
        _cross_attn_kernel, num_heads=num_heads, head_dim=head_dim,
        compute_dtype=compute_dtype)

    # TODO(synk): for very large HD maps (large Nk) add an Nk grid axis with a
    # flash-style online softmax; Nq tiling alone does not need one.
    out = pl.pallas_call(
        kernel,
        out_shape=jax.ShapeDtypeStruct((BT, D, Nq), out_dtype),
        grid_spec=pltpu.PrefetchScalarGridSpec(
            num_scalar_prefetch=0,
            # Nq axis innermost so k/v/weight blocks stay resident across tiles.
            grid=(BT // tb, Nq // ntile),
            in_specs=[
                pl.BlockSpec((tb, D, ntile), lambda i, j: (i, 0, j)),   # q
                pl.BlockSpec((tb, C, Nk), lambda i, j: (i, 0, 0)),      # k
                pl.BlockSpec((tb, C, Nk), lambda i, j: (i, 0, 0)),      # v
                pl.BlockSpec((inner, D), lambda i, j: (0, 0)),          # Wq (pre-scaled)
                pl.BlockSpec((inner, C), lambda i, j: (0, 0)),          # Wk
                pl.BlockSpec((inner, C), lambda i, j: (0, 0)),          # Wv
                pl.BlockSpec((D, inner), lambda i, j: (0, 0)),          # Wo
                pl.BlockSpec((D, 1), lambda i, j: (0, 0)),              # bias
            ],
            out_specs=pl.BlockSpec((tb, D, ntile), lambda i, j: (i, 0, j)),
        ),
        compiler_params=pltpu.CompilerParams(
            dimension_semantics=("parallel", "parallel"),
            vmem_limit_bytes=vmem_limit),
    )(q, k, v, wq, wk, wv, wo, bo)

    # '(b t) d (h w) -> b t d h w' : pure reshape, no transpose.
    return out.reshape(B, T, D, H, W)


def reference(query, key, value, params, *, num_heads, head_dim):
    """Pure-JAX reference reproducing the PyTorch forward (f32 throughout)."""
    B, T, D, H, W = query.shape
    _, _, C, Hm, Wm = key.shape
    Nq, Nk = H * W, Hm * Wm
    q = query.reshape(B, T, D, Nq).transpose(0, 1, 3, 2)   # b t n d
    k = key.reshape(B, T, C, Nk).transpose(0, 1, 3, 2)
    v = value.reshape(B, T, C, Nk).transpose(0, 1, 3, 2)
    Q = q @ params["wq"].T
    K = k @ params["wk"].T
    V = v @ params["wv"].T

    def split(x, n):  # b t n (h d) -> b t h n d
        return x.reshape(B, T, n, num_heads, head_dim).transpose(0, 1, 3, 2, 4)

    Qh, Kh, Vh = split(Q, Nq), split(K, Nk), split(V, Nk)
    s = jnp.einsum("bthqd,bthkd->bthqk", Qh, Kh) * (head_dim ** -0.5)
    p = jax.nn.softmax(s, axis=-1)
    o = jnp.einsum("bthqk,bthkd->bthqd", p, Vh)
    o = o.transpose(0, 1, 3, 2, 4).reshape(B, T, Nq, num_heads * head_dim)
    o = o @ params["wo"].T + params["bo"]
    return o.transpose(0, 1, 3, 2).reshape(B, T, D, H, W)


if __name__ == "__main__":
    # Small shapes consistent with the module's forward.
    B, T = 2, 2
    D = 8            # query_dim (BEV feature channels)
    C = 6            # key_dim (HD-map channels)
    H = W = 8        # query spatial -> Nq = 64
    Hm = Wm = 4      # key spatial   -> Nk = 16
    num_heads, head_dim = 4, 32
    inner = num_heads * head_dim

    key0 = jax.random.PRNGKey(0)
    k1, k2, k3, k4, k5, k6, k7, k8 = jax.random.split(key0, 8)

    query = jax.random.normal(k1, (B, T, D, H, W), jnp.float32)
    key_t = jax.random.normal(k2, (B, T, C, Hm, Wm), jnp.float32)
    value = jax.random.normal(k3, (B, T, C, Hm, Wm), jnp.float32)

    # Parameters in PyTorch nn.Linear layout: weight is (out_features, in_features).
    params = {
        "wq": 0.05 * jax.random.normal(k4, (inner, D), jnp.float32),
        "wk": 0.05 * jax.random.normal(k5, (inner, C), jnp.float32),
        "wv": 0.05 * jax.random.normal(k6, (inner, C), jnp.float32),
        "wo": 0.05 * jax.random.normal(k7, (D, inner), jnp.float32),
        "bo": 0.01 * jax.random.normal(k8, (D,), jnp.float32),
    }

    out = cross_attention(query, key_t, value, params,
                          num_heads=num_heads, head_dim=head_dim)
    out = jax.block_until_ready(out)

    ref = reference(query, key_t, value, params,
                    num_heads=num_heads, head_dim=head_dim)
    assert out.shape == (B, T, D, H, W)
    # bf16 activations/weights on the MXU + approx reciprocal -> loose tolerance.
    max_err = float(jnp.max(jnp.abs(out - ref)))
    assert jnp.allclose(out, ref, atol=2e-2, rtol=2e-2), f"max abs err {max_err}"
    print("KERNEL_OK")
</pallas_src>

<mosaic_0001>
module attributes {stable_mosaic.version = 11 : i64} {
  func.func @_cross_attn_kernel(%arg0: i32, %arg1: i32, %arg2: memref<2x8x64xbf16, #tpu.memory_space<vmem>>, %arg3: memref<2x6x16xbf16, #tpu.memory_space<vmem>>, %arg4: memref<2x6x16xbf16, #tpu.memory_space<vmem>>, %arg5: memref<128x8xbf16, #tpu.memory_space<vmem>>, %arg6: memref<128x6xbf16, #tpu.memory_space<vmem>>, %arg7: memref<128x6xbf16, #tpu.memory_space<vmem>>, %arg8: memref<8x128xbf16, #tpu.memory_space<vmem>>, %arg9: memref<8x1xf32, #tpu.memory_space<vmem>>, %arg10: memref<2x8x64xf32, #tpu.memory_space<vmem>>) attributes {dimension_semantics = [#tpu.dimension_semantics<parallel>, #tpu.dimension_semantics<parallel>], iteration_bounds = array<i64: 2, 1>, scalar_prefetch = 0 : i64, scratch_operands = 0 : i64, tpu.core_type = #tpu.core_type<tc>, window_params = [{transform_indices = @transform_0, window_bounds = array<i64: 2, 8, 64>}, {transform_indices = @transform_1, window_bounds = array<i64: 2, 6, 16>}, {transform_indices = @transform_2, window_bounds = array<i64: 2, 6, 16>}, {pipeline_mode = #tpu.pipeline_mode<synchronous>, transform_indices = @transform_3, window_bounds = array<i64: 128, 8>}, {pipeline_mode = #tpu.pipeline_mode<synchronous>, transform_indices = @transform_4, window_bounds = array<i64: 128, 6>}, {pipeline_mode = #tpu.pipeline_mode<synchronous>, transform_indices = @transform_5, window_bounds = array<i64: 128, 6>}, {pipeline_mode = #tpu.pipeline_mode<synchronous>, transform_indices = @transform_6, window_bounds = array<i64: 8, 128>}, {pipeline_mode = #tpu.pipeline_mode<synchronous>, transform_indices = @transform_7, window_bounds = array<i64: 8, 1>}, {transform_indices = @transform_8, window_bounds = array<i64: 2, 8, 64>}]} {
    %c0 = arith.constant 0 : index
    %c0_0 = arith.constant 0 : index
    %0 = vector.load %arg5[%c0, %c0_0] : memref<128x8xbf16, #tpu.memory_space<vmem>>, vector<128x8xbf16>
    %c0_1 = arith.constant 0 : index
    %c0_2 = arith.constant 0 : index
    %1 = vector.load %arg6[%c0_1, %c0_2] : memref<128x6xbf16, #tpu.memory_space<vmem>>, vector<128x6xbf16>
    %c0_3 = arith.constant 0 : index
    %c0_4 = arith.constant 0 : index
    %2 = vector.load %arg7[%c0_3, %c0_4] : memref<128x6xbf16, #tpu.memory_space<vmem>>, vector<128x6xbf16>
    %c0_5 = arith.constant 0 : index
    %c0_6 = arith.constant 0 : index
    %3 = vector.load %arg8[%c0_5, %c0_6] : memref<8x128xbf16, #tpu.memory_space<vmem>>, vector<8x128xbf16>
    %c0_7 = arith.constant 0 : index
    %c0_8 = arith.constant 0 : index
    %4 = vector.load %arg9[%c0_7, %c0_8] : memref<8x1xf32, #tpu.memory_space<vmem>>, vector<8x1xf32>
    %5 = vector.shape_cast %4 : vector<8x1xf32> to vector<8x1xf32>
    %6 = vector.broadcast %5 : vector<8x1xf32> to vector<8x64xf32>
    %7 = vector.extract_strided_slice %3 {offsets = [0, 0], sizes = [8, 32], strides = [1, 1]} : vector<8x128xbf16> to vector<8x32xbf16>
    %8 = vector.extract_strided_slice %3 {offsets = [0, 32], sizes = [8, 32], strides = [1, 1]} : vector<8x128xbf16> to vector<8x32xbf16>
    %9 = vector.extract_strided_slice %3 {offsets = [0, 64], sizes = [8, 32], strides = [1, 1]} : vector<8x128xbf16> to vector<8x32xbf16>
    %10 = vector.extract_strided_slice %3 {offsets = [0, 96], sizes = [8, 32], strides = [1, 1]} : vector<8x128xbf16> to vector<8x32xbf16>
    %c0_i32 = arith.constant 0 : i32
    %c2_i32 = arith.constant 2 : i32
    %11 = arith.addi %c0_i32, %c2_i32 : i32
    %c1_i32 = arith.constant 1 : i32
    scf.for %arg11 = %c0_i32 to %11 step %c1_i32  : i32 {
      %12 = arith.index_cast %arg11 : i32 to index
      %c0_10 = arith.constant 0 : index
      %c0_11 = arith.constant 0 : index
      %13 = vector.load %arg2[%12, %c0_10, %c0_11] : memref<2x8x64xbf16, #tpu.memory_space<vmem>>, vector<1x8x64xbf16>
      %14 = vector.shape_cast %13 : vector<1x8x64xbf16> to vector<8x64xbf16>
      %15 = arith.index_cast %arg11 : i32 to index
      %c0_12 = arith.constant 0 : index
      %c0_13 = arith.constant 0 : index
      %16 = vector.load %arg3[%15, %c0_12, %c0_13] : memref<2x6x16xbf16, #tpu.memory_space<vmem>>, vector<1x6x16xbf16>
      %17 = vector.shape_cast %16 : vector<1x6x16xbf16> to vector<6x16xbf16>
      %18 = arith.index_cast %arg11 : i32 to index
      %c0_14 = arith.constant 0 : index
      %c0_15 = arith.constant 0 : index
      %19 = vector.load %arg4[%18, %c0_14, %c0_15] : memref<2x6x16xbf16, #tpu.memory_space<vmem>>, vector<1x6x16xbf16>
      %20 = vector.shape_cast %19 : vector<1x6x16xbf16> to vector<6x16xbf16>
      %cst = arith.constant dense<0.000000e+00> : vector<128x64xf32>
      %21 = tpu.matmul %0, %14, %cst {dimension_numbers = #tpu.dot_dimension_numbers<[1], [0], [0], [1], [0, 0, 1, 1], [], []>} : vector<128x8xbf16>, vector<8x64xbf16>, vector<128x64xf32> -> vector<128x64xf32>
      %22 = arith.truncf %21 : vector<128x64xf32> to vector<128x64xbf16>
      %cst_16 = arith.constant dense<0.000000e+00> : vector<128x16xf32>
      %23 = tpu.matmul %1, %17, %cst_16 {dimension_numbers = #tpu.dot_dimension_numbers<[1], [0], [0], [1], [0, 0, 1, 1], [], []>} : vector<128x6xbf16>, vector<6x16xbf16>, vector<128x16xf32> -> vector<128x16xf32>
      %24 = arith.truncf %23 : vector<128x16xf32> to vector<128x16xbf16>
      %cst_17 = arith.constant dense<0.000000e+00> : vector<128x16xf32>
      %25 = tpu.matmul %2, %20, %cst_17 {dimension_numbers = #tpu.dot_dimension_numbers<[1], [0], [0], [1], [0, 0, 1, 1], [], []>} : vector<128x6xbf16>, vector<6x16xbf16>, vector<128x16xf32> -> vector<128x16xf32>
      %26 = arith.truncf %25 : vector<128x16xf32> to vector<128x16xbf16>
      %27 = vector.extract_strided_slice %22 {offsets = [0, 0], sizes = [32, 64], strides = [1, 1]} : vector<128x64xbf16> to vector<32x64xbf16>
      %28 = vector.extract_strided_slice %24 {offsets = [0, 0], sizes = [32, 16], strides = [1, 1]} : vector<128x16xbf16> to vector<32x16xbf16>
      %29 = vector.extract_strided_slice %26 {offsets = [0, 0], sizes = [32, 16], strides = [1, 1]} : vector<128x16xbf16> to vector<32x16xbf16>
      %cst_18 = arith.constant dense<0.000000e+00> : vector<64x16xf32>
      %30 = tpu.matmul %27, %28, %cst_18 {dimension_numbers = #tpu.dot_dimension_numbers<[0], [0], [1], [1], [0, 1, 1, 1], [], []>} : vector<32x64xbf16>, vector<32x16xbf16>, vector<64x16xf32> -> vector<64x16xf32>
      %cst_19 = arith.constant dense<0xFF800000> : vector<64xf32>
      %31 = vector.multi_reduction <maximumf>, %30, %cst_19 [1] : vector<64x16xf32> to vector<64xf32>
      %32 = vector.shape_cast %31 : vector<64xf32> to vector<64x1xf32>
      %33 = vector.broadcast %32 : vector<64x1xf32> to vector<64x16xf32>
      %34 = arith.subf %30, %33 : vector<64x16xf32>
      %35 = math.exp %34 : vector<64x16xf32>
      %cst_20 = arith.constant dense<0.000000e+00> : vector<64xf32>
      %36 = vector.multi_reduction <add>, %35, %cst_20 [1] : vector<64x16xf32> to vector<64xf32>
      %37 = vector.shape_cast %36 : vector<64xf32> to vector<64x1xf32>
      %38 = tpu.reciprocal %37 {approx = true} : vector<64x1xf32> -> vector<64x1xf32>
      %39 = vector.broadcast %38 : vector<64x1xf32> to vector<64x16xf32>
      %40 = arith.mulf %35, %39 : vector<64x16xf32>
      %41 = arith.truncf %40 : vector<64x16xf32> to vector<64x16xbf16>
      %cst_21 = arith.constant dense<0.000000e+00> : vector<32x64xf32>
      %42 = tpu.matmul %29, %41, %cst_21 {dimension_numbers = #tpu.dot_dimension_numbers<[1], [1], [0], [0], [0, 0, 1, 0], [], []>} : vector<32x16xbf16>, vector<64x16xbf16>, vector<32x64xf32> -> vector<32x64xf32>
      %43 = arith.truncf %42 : vector<32x64xf32> to vector<32x64xbf16>
      %cst_22 = arith.constant dense<0.000000e+00> : vector<8x64xf32>
      %44 = tpu.matmul %7, %43, %cst_22 {dimension_numbers = #tpu.dot_dimension_numbers<[1], [0], [0], [1], [0, 0, 1, 1], [], []>} : vector<8x32xbf16>, vector<32x64xbf16>, vector<8x64xf32> -> vector<8x64xf32>
      %45 = arith.addf %6, %44 : vector<8x64xf32>
      %46 = vector.extract_strided_slice %22 {offsets = [32, 0], sizes = [32, 64], strides = [1, 1]} : vector<128x64xbf16> to vector<32x64xbf16>
      %47 = vector.extract_strided_slice %24 {offsets = [32, 0], sizes = [32, 16], strides = [1, 1]} : vector<128x16xbf16> to vector<32x16xbf16>
      %48 = vector.extract_strided_slice %26 {offsets = [32, 0], sizes = [32, 16], strides = [1, 1]} : vector<128x16xbf16> to vector<32x16xbf16>
      %cst_23 = arith.constant dense<0.000000e+00> : vector<64x16xf32>
      %49 = tpu.matmul %46, %47, %cst_23 {dimension_numbers = #tpu.dot_dimension_numbers<[0], [0], [1], [1], [0, 1, 1, 1], [], []>} : vector<32x64xbf16>, vector<32x16xbf16>, vector<64x16xf32> -> vector<64x16xf32>
      %cst_24 = arith.constant dense<0xFF800000> : vector<64xf32>
      %50 = vector.multi_reduction <maximumf>, %49, %cst_24 [1] : vector<64x16xf32> to vector<64xf32>
      %51 = vector.shape_cast %50 : vector<64xf32> to vector<64x1xf32>
      %52 = vector.broadcast %51 : vector<64x1xf32> to vector<64x16xf32>
      %53 = arith.subf %49, %52 : vector<64x16xf32>
      %54 = math.exp %53 : vector<64x16xf32>
      %cst_25 = arith.constant dense<0.000000e+00> : vector<64xf32>
      %55 = vector.multi_reduction <add>, %54, %cst_25 [1] : vector<64x16xf32> to vector<64xf32>
      %56 = vector.shape_cast %55 : vector<64xf32> to vector<64x1xf32>
      %57 = tpu.reciprocal %56 {approx = true} : vector<64x1xf32> -> vector<64x1xf32>
      %58 = vector.broadcast %57 : vector<64x1xf32> to vector<64x16xf32>
      %59 = arith.mulf %54, %58 : vector<64x16xf32>
      %60 = arith.truncf %59 : vector<64x16xf32> to vector<64x16xbf16>
      %cst_26 = arith.constant dense<0.000000e+00> : vector<32x64xf32>
      %61 = tpu.matmul %48, %60, %cst_26 {dimension_numbers = #tpu.dot_dimension_numbers<[1], [1], [0], [0], [0, 0, 1, 0], [], []>} : vector<32x16xbf16>, vector<64x16xbf16>, vector<32x64xf32> -> vector<32x64xf32>
      %62 = arith.truncf %61 : vector<32x64xf32> to vector<32x64xbf16>
      %cst_27 = arith.constant dense<0.000000e+00> : vector<8x64xf32>
      %63 = tpu.matmul %8, %62, %cst_27 {dimension_numbers = #tpu.dot_dimension_numbers<[1], [0], [0], [1], [0, 0, 1, 1], [], []>} : vector<8x32xbf16>, vector<32x64xbf16>, vector<8x64xf32> -> vector<8x64xf32>
      %64 = arith.addf %45, %63 : vector<8x64xf32>
      %65 = vector.extract_strided_slice %22 {offsets = [64, 0], sizes = [32, 64], strides = [1, 1]} : vector<128x64xbf16> to vector<32x64xbf16>
      %66 = vector.extract_strided_slice %24 {offsets = [64, 0], sizes = [32, 16], strides = [1, 1]} : vector<128x16xbf16> to vector<32x16xbf16>
      %67 = vector.extract_strided_slice %26 {offsets = [64, 0], sizes = [32, 16], strides = [1, 1]} : vector<128x16xbf16> to vector<32x16xbf16>
      %cst_28 = arith.constant dense<0.000000e+00> : vector<64x16xf32>
      %68 = tpu.matmul %65, %66, %cst_28 {dimension_numbers = #tpu.dot_dimension_numbers<[0], [0], [1], [1], [0, 1, 1, 1], [], []>} : vector<32x64xbf16>, vector<32x16xbf16>, vector<64x16xf32> -> vector<64x16xf32>
      %cst_29 = arith.constant dense<0xFF800000> : vector<64xf32>
      %69 = vector.multi_reduction <maximumf>, %68, %cst_29 [1] : vector<64x16xf32> to vector<64xf32>
      %70 = vector.shape_cast %69 : vector<64xf32> to vector<64x1xf32>
      %71 = vector.broadcast %70 : vector<64x1xf32> to vector<64x16xf32>
      %72 = arith.subf %68, %71 : vector<64x16xf32>
      %73 = math.exp %72 : vector<64x16xf32>
      %cst_30 = arith.constant dense<0.000000e+00> : vector<64xf32>
      %74 = vector.multi_reduction <add>, %73, %cst_30 [1] : vector<64x16xf32> to vector<64xf32>
      %75 = vector.shape_cast %74 : vector<64xf32> to vector<64x1xf32>
      %76 = tpu.reciprocal %75 {approx = true} : vector<64x1xf32> -> vector<64x1xf32>
      %77 = vector.broadcast %76 : vector<64x1xf32> to vector<64x16xf32>
      %78 = arith.mulf %73, %77 : vector<64x16xf32>
      %79 = arith.truncf %78 : vector<64x16xf32> to vector<64x16xbf16>
      %cst_31 = arith.constant dense<0.000000e+00> : vector<32x64xf32>
      %80 = tpu.matmul %67, %79, %cst_31 {dimension_numbers = #tpu.dot_dimension_numbers<[1], [1], [0], [0], [0, 0, 1, 0], [], []>} : vector<32x16xbf16>, vector<64x16xbf16>, vector<32x64xf32> -> vector<32x64xf32>
      %81 = arith.truncf %80 : vector<32x64xf32> to vector<32x64xbf16>
      %cst_32 = arith.constant dense<0.000000e+00> : vector<8x64xf32>
      %82 = tpu.matmul %9, %81, %cst_32 {dimension_numbers = #tpu.dot_dimension_numbers<[1], [0], [0], [1], [0, 0, 1, 1], [], []>} : vector<8x32xbf16>, vector<32x64xbf16>, vector<8x64xf32> -> vector<8x64xf32>
      %83 = arith.addf %64, %82 : vector<8x64xf32>
      %84 = vector.extract_strided_slice %22 {offsets = [96, 0], sizes = [32, 64], strides = [1, 1]} : vector<128x64xbf16> to vector<32x64xbf16>
      %85 = vector.extract_strided_slice %24 {offsets = [96, 0], sizes = [32, 16], strides = [1, 1]} : vector<128x16xbf16> to vector<32x16xbf16>
      %86 = vector.extract_strided_slice %26 {offsets = [96, 0], sizes = [32, 16], strides = [1, 1]} : vector<128x16xbf16> to vector<32x16xbf16>
      %cst_33 = arith.constant dense<0.000000e+00> : vector<64x16xf32>
      %87 = tpu.matmul %84, %85, %cst_33 {dimension_numbers = #tpu.dot_dimension_numbers<[0], [0], [1], [1], [0, 1, 1, 1], [], []>} : vector<32x64xbf16>, vector<32x16xbf16>, vector<64x16xf32> -> vector<64x16xf32>
      %cst_34 = arith.constant dense<0xFF800000> : vector<64xf32>
      %88 = vector.multi_reduction <maximumf>, %87, %cst_34 [1] : vector<64x16xf32> to vector<64xf32>
      %89 = vector.shape_cast %88 : vector<64xf32> to vector<64x1xf32>
      %90 = vector.broadcast %89 : vector<64x1xf32> to vector<64x16xf32>
      %91 = arith.subf %87, %90 : vector<64x16xf32>
      %92 = math.exp %91 : vector<64x16xf32>
      %cst_35 = arith.constant dense<0.000000e+00> : vector<64xf32>
      %93 = vector.multi_reduction <add>, %92, %cst_35 [1] : vector<64x16xf32> to vector<64xf32>
      %94 = vector.shape_cast %93 : vector<64xf32> to vector<64x1xf32>
      %95 = tpu.reciprocal %94 {approx = true} : vector<64x1xf32> -> vector<64x1xf32>
      %96 = vector.broadcast %95 : vector<64x1xf32> to vector<64x16xf32>
      %97 = arith.mulf %92, %96 : vector<64x16xf32>
      %98 = arith.truncf %97 : vector<64x16xf32> to vector<64x16xbf16>
      %cst_36 = arith.constant dense<0.000000e+00> : vector<32x64xf32>
      %99 = tpu.matmul %86, %98, %cst_36 {dimension_numbers = #tpu.dot_dimension_numbers<[1], [1], [0], [0], [0, 0, 1, 0], [], []>} : vector<32x16xbf16>, vector<64x16xbf16>, vector<32x64xf32> -> vector<32x64xf32>
      %100 = arith.truncf %99 : vector<32x64xf32> to vector<32x64xbf16>
      %cst_37 = arith.constant dense<0.000000e+00> : vector<8x64xf32>
      %101 = tpu.matmul %10, %100, %cst_37 {dimension_numbers = #tpu.dot_dimension_numbers<[1], [0], [0], [1], [0, 0, 1, 1], [], []>} : vector<8x32xbf16>, vector<32x64xbf16>, vector<8x64xf32> -> vector<8x64xf32>
      %102 = arith.addf %83, %101 : vector<8x64xf32>
      %103 = arith.index_cast %arg11 : i32 to index
      %c0_38 = arith.constant 0 : index
      %c0_39 = arith.constant 0 : index
      %104 = vector.load %arg10[%103, %c0_38, %c0_39] : memref<2x8x64xf32, #tpu.memory_space<vmem>>, vector<1x8x64xf32>
      %105 = vector.shape_cast %104 : vector<1x8x64xf32> to vector<8x64xf32>
      %106 = vector.shape_cast %102 : vector<8x64xf32> to vector<1x8x64xf32>
      tpu.vector_store %arg10[%103, %c0_38, %c0_39], %106 {strides = array<i32>} : memref<2x8x64xf32, #tpu.memory_space<vmem>>, vector<1x8x64xf32>,
    }
    %c2_i32_9 = arith.constant 2 : i32
    return
  }
  func.func @transform_0(%arg0: i32, %arg1: i32) -> (i32, i32, i32) {
    %c0_i32 = arith.constant 0 : i32
    %c0_i32_0 = arith.constant 0 : i32
    return %arg0, %c0_i32, %arg1 : i32, i32, i32
  }
  func.func @transform_1(%arg0: i32, %arg1: i32) -> (i32, i32, i32) {
    %c0_i32 = arith.constant 0 : i32
    %c0_i32_0 = arith.constant 0 : i32
    %c0_i32_1 = arith.constant 0 : i32
    return %arg0, %c0_i32, %c0_i32_0 : i32, i32, i32
  }
  func.func @transform_2(%arg0: i32, %arg1: i32) -> (i32, i32, i32) {
    %c0_i32 = arith.constant 0 : i32
    %c0_i32_0 = arith.constant 0 : i32
    %c0_i32_1 = arith.constant 0 : i32
    return %arg0, %c0_i32, %c0_i32_0 : i32, i32, i32
  }
  func.func @transform_3(%arg0: i32, %arg1: i32) -> (i32, i32) {
    %c0_i32 = arith.constant 0 : i32
    %c0_i32_0 = arith.constant 0 : i32
    %c0_i32_1 = arith.constant 0 : i32
    return %c0_i32, %c0_i32_0 : i32, i32
  }
  func.func @transform_4(%arg0: i32, %arg1: i32) -> (i32, i32) {
    %c0_i32 = arith.constant 0 : i32
    %c0_i32_0 = arith.constant 0 : i32
    %c0_i32_1 = arith.constant 0 : i32
    return %c0_i32, %c0_i32_0 : i32, i32
  }
  func.func @transform_5(%arg0: i32, %arg1: i32) -> (i32, i32) {
    %c0_i32 = arith.constant 0 : i32
    %c0_i32_0 = arith.constant 0 : i32
    %c0_i32_1 = arith.constant 0 : i32
    return %c0_i32, %c0_i32_0 : i32, i32
  }
  func.func @transform_6(%arg0: i32, %arg1: i32) -> (i32, i32) {
    %c0_i32 = arith.constant 0 : i32
    %c0_i32_0 = arith.constant 0 : i32
    %c0_i32_1 = arith.constant 0 : i32
    return %c0_i32, %c0_i32_0 : i32, i32
  }
  func.func @transform_7(%arg0: i32, %arg1: i32) -> (i32, i32) {
    %c0_i32 = arith.constant 0 : i32
    %c0_i32_0 = arith.constant 0 : i32
    %c0_i32_1 = arith.constant 0 : i32
    return %c0_i32, %c0_i32_0 : i32, i32
  }
  func.func @transform_8(%arg0: i32, %arg1: i32) -> (i32, i32, i32) {
    %c0_i32 = arith.constant 0 : i32
    %c0_i32_0 = arith.constant 0 : i32
    return %arg0, %c0_i32, %arg1 : i32, i32, i32
  }
}

</mosaic_0001>

<llo_original>
// kernel: tpu_custom_call.1
$region0: #{tpu_custom_call.1}
  #allocation0 [shape = 'u32[]', space=smem, size = 0x4, offset = 0x4, fixed_abs, tag = 'smem constant byte address 0x4 - core index']
  #allocation1 [shape = 'u32[144,128]{1,0:T(1,128)}', space=vmem, size = 0x12000, scoped, tag = 'internal scratch']
  %s0 = inlined_call_operand.vmem [shape: bf16[4,8,64], index: 0, kind: input, shape index: {}]
  %s1 = inlined_call_operand.vmem [shape: bf16[4,6,16], index: 1, kind: input, shape index: {}]
  %s2 = inlined_call_operand.vmem [shape: bf16[4,6,16], index: 2, kind: input, shape index: {}]
  %s3 = inlined_call_operand.vmem [shape: bf16[128,8], index: 3, kind: input, shape index: {}]
  %s4 = inlined_call_operand.vmem [shape: bf16[128,6], index: 4, kind: input, shape index: {}]
  %s5 = inlined_call_operand.vmem [shape: bf16[128,6], index: 5, kind: input, shape index: {}]
  %s6 = inlined_call_operand.vmem [shape: bf16[8,128], index: 6, kind: input, shape index: {}]
  %s7 = inlined_call_operand.vmem [shape: f32[8,1], index: 7, kind: input, shape index: {}]
  %s8 = inlined_call_operand.hbm [shape: f32[4,8,64], index: 8, kind: output, shape index: {}]
  %s9 = sld [smem:[#allocation0]]
  $region72: #{tpu_custom_call.1} parent=0
    _
  %s11 = ssub.s32 1, %s9
  %s12 = scalar_select 0, %s11, %s9
  $region1: #{tpu_custom_call.1} parent=0
    #allocation2 [shape = 'u8[16384]{0}', space=vmem, size = 0x4000, scoped, tag = 'output window, operand 0']
    #allocation3 [shape = 's32[2]{0}', space=sflag, size = 0x8, scoped, tag = 'scoped memory for tpu_custom_call.1']
    %13 = vsyncpa [#allocation3], 0
    %s14 = scalar_lea.sflag [#allocation3], 1
    %15 = vsyncpa %s14, 0
    loop: start=0, step=1, limit=4
    $region2: #{tpu_custom_call.1} parent=1 // loop_pre_header
      _
    $region3: #{tpu_custom_call.1} parent=1 // loop_header
      %s17 = sphi 0, %s21
      %p18 = scmp.ge.s32.totalorder %s17, 4
      %s24 = sphi 0, %s36
      %s25 = sphi 0, %s32
      %s26 = sphi 0, %s24
      %s27 = sphi 0, %s25
      %s28 = sphi 0, %s26
      %s29 = sphi 0, %s27
      %s41 = sphi 0, %s43
      %s44 = sphi 0, %s41
      %s45 = sphi 0, %s44
      %s61 = sphi 0, %s45
      %s67 = sphi 0, %s69
      %s70 = sphi 0, %s67
      %s71 = sphi 0, %s70
      %s87 = sphi 0, %s71
      %s93 = sphi 0, %s95
      %s96 = sphi 0, %s93
      %s97 = sphi 0, %s96
      %s113 = sphi 0, %s97
      %s117 = sphi 0, %s117
      %s119 = sphi 0, %s117
      %s120 = sphi 0, %s119
      %s134 = sphi 0, %s120
      %s138 = sphi 0, %s138
      %s140 = sphi 0, %s138
      %s141 = sphi 0, %s140
      %s155 = sphi 0, %s141
      %s159 = sphi 0, %s159
      %s161 = sphi 0, %s159
      %s162 = sphi 0, %s161
      %s176 = sphi 0, %s162
      %s180 = sphi 0, %s180
      %s182 = sphi 0, %s180
      %s183 = sphi 0, %s182
      %s197 = sphi 0, %s183
      %s201 = sphi 0, %s201
      %s203 = sphi 0, %s201
      %s204 = sphi 0, %s203
      %s218 = sphi 0, %s204
      %s226 = sphi 0, %s228
      %s229 = sphi 0, %s226
      %s230 = sphi 0, %s229
      %s246 = sphi 0, %s230
    $region4: #{tpu_custom_call.1} parent=1 // loop_header_branch
      %20 = sbr.rel (%p18) target = $region8
    $region5: #{tpu_custom_call.1} parent=1 // loop_body
      %s22 = ssub.s32 %s17, 1
      %s23 = ssub.s32 %s17, 2
      %s30 = sadd.s32 1, %s25
      %p31 = scmp.ge.s32.totalorder %s30, 1
      %s32 = scalar_select %p31, 0, %s30
      %s33 = sadd.s32 1, %s24
      %s34 = scalar_select %p31, %s33, %s24
      %p35 = scmp.ge.s32.totalorder %s34, 2
      %s36 = scalar_select %p35, 0, %s34
      %s37 = ssub.s32 %s24, %s36
      %s38 = ssub.s32 %s25, %s32
      %s39 = sor.u32 %s37, %s38
      %p40 = scmp.eq.s32.totalorder %s39, 0
      %s42 = sadd.s32 %s41, 1
      %s43 = scalar_select %p40, %s41, %s42
      %p46 = pneg %p40
      %p47 = scmp.eq.s32.totalorder %s17, 1
      %p48 = por %p46, %p47
      %p49 = scmp.ne.s32.totalorder %s41, %s44
      %p50 = scmp.eq.s32.totalorder %s17, 0
      %p51 = por %p49, %p50
      %p52 = scmp.ne.s32.totalorder %s41, %s44
      %p53 = scmp.eq.s32.totalorder %s22, 1
      %p54 = por %p52, %p53
      %p55 = scmp.ne.s32.totalorder %s44, %s45
      %p56 = scmp.eq.s32.totalorder %s22, 0
      %p57 = por %p55, %p56
      %p58 = scmp.ne.s32.totalorder %s44, %s45
      %p59 = scmp.eq.s32.totalorder %s23, 1
      %p60 = por %p58, %p59
      %p62 = scmp.ne.s32.totalorder %s45, %s61
      %p63 = scmp.eq.s32.totalorder %s23, 0
      %p64 = por %p62, %p63
      %s65 = ssub.s32 %s24, %s36
      %p66 = scmp.eq.s32.totalorder %s65, 0
      %s68 = sadd.s32 %s67, 1
      %s69 = scalar_select %p66, %s67, %s68
      %p72 = pneg %p66
      %p73 = scmp.eq.s32.totalorder %s17, 1
      %p74 = por %p72, %p73
      %p75 = scmp.ne.s32.totalorder %s67, %s70
      %p76 = scmp.eq.s32.totalorder %s17, 0
      %p77 = por %p75, %p76
      %p78 = scmp.ne.s32.totalorder %s67, %s70
      %p79 = scmp.eq.s32.totalorder %s22, 1
      %p80 = por %p78, %p79
      %p81 = scmp.ne.s32.totalorder %s70, %s71
      %p82 = scmp.eq.s32.totalorder %s22, 0
      %p83 = por %p81, %p82
      %p84 = scmp.ne.s32.totalorder %s70, %s71
      %p85 = scmp.eq.s32.totalorder %s23, 1
      %p86 = por %p84, %p85
      %p88 = scmp.ne.s32.totalorder %s71, %s87
      %p89 = scmp.eq.s32.totalorder %s23, 0
      %p90 = por %p88, %p89
      %s91 = ssub.s32 %s24, %s36
      %p92 = scmp.eq.s32.totalorder %s91, 0
      %s94 = sadd.s32 %s93, 1
      %s95 = scalar_select %p92, %s93, %s94
      %p98 = pneg %p92
      %p99 = scmp.eq.s32.totalorder %s17, 1
      %p100 = por %p98, %p99
      %p101 = scmp.ne.s32.totalorder %s93, %s96
      %p102 = scmp.eq.s32.totalorder %s17, 0
      %p103 = por %p101, %p102
      %p104 = scmp.ne.s32.totalorder %s93, %s96
      %p105 = scmp.eq.s32.totalorder %s22, 1
      %p106 = por %p104, %p105
      %p107 = scmp.ne.s32.totalorder %s96, %s97
      %p108 = scmp.eq.s32.totalorder %s22, 0
      %p109 = por %p107, %p108
      %p110 = scmp.ne.s32.totalorder %s96, %s97
      %p111 = scmp.eq.s32.totalorder %s23, 1
      %p112 = por %p110, %p111
      %p114 = scmp.ne.s32.totalorder %s97, %s113
      %p115 = scmp.eq.s32.totalorder %s23, 0
      %p116 = por %p114, %p115
      %s118 = sadd.s32 %s117, 1
      %p121 = scmp.eq.s32.totalorder %s17, 1
      %p122 = scmp.ne.s32.totalorder %s117, %s119
      %p123 = scmp.eq.s32.totalorder %s17, 0
      %p124 = por %p122, %p123
      %p125 = scmp.ne.s32.totalorder %s117, %s119
      %p126 = scmp.eq.s32.totalorder %s22, 1
      %p127 = por %p125, %p126
      %p128 = scmp.ne.s32.totalorder %s119, %s120
      %p129 = scmp.eq.s32.totalorder %s22, 0
      %p130 = por %p128, %p129
      %p131 = scmp.ne.s32.totalorder %s119, %s120
      %p132 = scmp.eq.s32.totalorder %s23, 1
      %p133 = por %p131, %p132
      %p135 = scmp.ne.s32.totalorder %s120, %s134
      %p136 = scmp.eq.s32.totalorder %s23, 0
      %p137 = por %p135, %p136
      %s139 = sadd.s32 %s138, 1
      %p142 = scmp.eq.s32.totalorder %s17, 1
      %p143 = scmp.ne.s32.totalorder %s138, %s140
      %p144 = scmp.eq.s32.totalorder %s17, 0
      %p145 = por %p143, %p144
      %p146 = scmp.ne.s32.totalorder %s138, %s140
      %p147 = scmp.eq.s32.totalorder %s22, 1
      %p148 = por %p146, %p147
      %p149 = scmp.ne.s32.totalorder %s140, %s141
      %p150 = scmp.eq.s32.totalorder %s22, 0
      %p151 = por %p149, %p150
      %p152 = scmp.ne.s32.totalorder %s140, %s141
      %p153 = scmp.eq.s32.totalorder %s23, 1
      %p154 = por %p152, %p153
      %p156 = scmp.ne.s32.totalorder %s141, %s155
      %p157 = scmp.eq.s32.totalorder %s23, 0
      %p158 = por %p156, %p157
      %s160 = sadd.s32 %s159, 1
      %p163 = scmp.eq.s32.totalorder %s17, 1
      %p164 = scmp.ne.s32.totalorder %s159, %s161
      %p165 = scmp.eq.s32.totalorder %s17, 0
      %p166 = por %p164, %p165
      %p167 = scmp.ne.s32.totalorder %s159, %s161
      %p168 = scmp.eq.s32.totalorder %s22, 1
      %p169 = por %p167, %p168
      %p170 = scmp.ne.s32.totalorder %s161, %s162
      %p171 = scmp.eq.s32.totalorder %s22, 0
      %p172 = por %p170, %p171
      %p173 = scmp.ne.s32.totalorder %s161, %s162
      %p174 = scmp.eq.s32.totalorder %s23, 1
      %p175 = por %p173, %p174
      %p177 = scmp.ne.s32.totalorder %s162, %s176
      %p178 = scmp.eq.s32.totalorder %s23, 0
      %p179 = por %p177, %p178
      %s181 = sadd.s32 %s180, 1
      %p184 = scmp.eq.s32.totalorder %s17, 1
      %p185 = scmp.ne.s32.totalorder %s180, %s182
      %p186 = scmp.eq.s32.totalorder %s17, 0
      %p187 = por %p185, %p186
      %p188 = scmp.ne.s32.totalorder %s180, %s182
      %p189 = scmp.eq.s32.totalorder %s22, 1
      %p190 = por %p188, %p189
      %p191 = scmp.ne.s32.totalorder %s182, %s183
      %p192 = scmp.eq.s32.totalorder %s22, 0
      %p193 = por %p191, %p192
      %p194 = scmp.ne.s32.totalorder %s182, %s183
      %p195 = scmp.eq.s32.totalorder %s23, 1
      %p196 = por %p194, %p195
      %p198 = scmp.ne.s32.totalorder %s183, %s197
      %p199 = scmp.eq.s32.totalorder %s23, 0
      %p200 = por %p198, %p199
      %s202 = sadd.s32 %s201, 1
      %p205 = scmp.eq.s32.totalorder %s17, 1
      %p206 = scmp.ne.s32.totalorder %s201, %s203
      %p207 = scmp.eq.s32.totalorder %s17, 0
      %p208 = por %p206, %p207
      %p209 = scmp.ne.s32.totalorder %s201, %s203
      %p210 = scmp.eq.s32.totalorder %s22, 1
      %p211 = por %p209, %p210
      %p212 = scmp.ne.s32.totalorder %s203, %s204
      %p213 = scmp.eq.s32.totalorder %s22, 0
      %p214 = por %p212, %p213
      %p215 = scmp.ne.s32.totalorder %s203, %s204
      %p216 = scmp.eq.s32.totalorder %s23, 1
      %p217 = por %p215, %p216
      %p219 = scmp.ne.s32.totalorder %s204, %s218
      %p220 = scmp.eq.s32.totalorder %s23, 0
      %p221 = por %p219, %p220
      %s222 = ssub.s32 %s24, %s36
      %s223 = ssub.s32 %s25, %s32
      %s224 = sor.u32 %s222, %s223
      %p225 = scmp.eq.s32.totalorder %s224, 0
      %s227 = sadd.s32 %s226, 1
      %s228 = scalar_select %p225, %s226, %s227
      %p231 = pneg %p225
      %p232 = scmp.eq.s32.totalorder %s17, 1
      %p233 = por %p231, %p232
      %p234 = scmp.ne.s32.totalorder %s226, %s229
      %p235 = scmp.eq.s32.totalorder %s17, 0
      %p236 = por %p234, %p235
      %p237 = scmp.ne.s32.totalorder %s226, %s229
      %p238 = scmp.eq.s32.totalorder %s22, 1
      %p239 = por %p237, %p238
      %p240 = scmp.ne.s32.totalorder %s229, %s230
      %p241 = scmp.eq.s32.totalorder %s22, 0
      %p242 = por %p240, %p241
      %p243 = scmp.ne.s32.totalorder %s229, %s230
      %p244 = scmp.eq.s32.totalorder %s23, 1
      %p245 = por %p243, %p244
      %p247 = scmp.ne.s32.totalorder %s230, %s246
      %p248 = scmp.eq.s32.totalorder %s23, 0
      %p249 = por %p247, %p248
      %p250 = scmp.le.s32.totalorder 1, %s17
      %p251 = scmp.lt.s32.totalorder %s17, 3
      %p252 = pnand %p250, %p251
      %p253 = pneg %p252
      // Predicated region
      $region9: #{tpu_custom_call.1} parent=5 // pred_check
        _
      $region10: #{tpu_custom_call.1} parent=5 // pred_check_branch
        %255 = sbr.rel (%p252) target = $region12
      $region11: #{tpu_custom_call.1} parent=5 // pred_region
        %s256 = ssub.s32 %s17, 1
        // Predicated region
        $region13: #{tpu_custom_call.1} parent=11 // pred_check
          %p257 = pneg %p130
        $region14: #{tpu_custom_call.1} parent=11 // pred_check_branch
          %259 = sbr.rel (%p257) target = $region16
        $region15: #{tpu_custom_call.1} parent=11 // pred_region
          _
        $region16: #{tpu_custom_call.1} parent=11 // pred_fallthru
          _
        // Predicated region
        $region17: #{tpu_custom_call.1} parent=11 // pred_check
          %p260 = pneg %p151
        $region18: #{tpu_custom_call.1} parent=11 // pred_check_branch
          %262 = sbr.rel (%p260) target = $region20
        $region19: #{tpu_custom_call.1} parent=11 // pred_region
          _
        $region20: #{tpu_custom_call.1} parent=11 // pred_fallthru
          _
        // Predicated region
        $region21: #{tpu_custom_call.1} parent=11 // pred_check
          %p263 = pneg %p172
        $region22: #{tpu_custom_call.1} parent=11 // pred_check_branch
          %265 = sbr.rel (%p263) target = $region24
        $region23: #{tpu_custom_call.1} parent=11 // pred_region
          _
        $region24: #{tpu_custom_call.1} parent=11 // pred_fallthru
          _
        // Predicated region
        $region25: #{tpu_custom_call.1} parent=11 // pred_check
          %p266 = pneg %p193
        $region26: #{tpu_custom_call.1} parent=11 // pred_check_branch
          %268 = sbr.rel (%p266) target = $region28
        $region27: #{tpu_custom_call.1} parent=11 // pred_region
          _
        $region28: #{tpu_custom_call.1} parent=11 // pred_fallthru
          _
        // Predicated region
        $region29: #{tpu_custom_call.1} parent=11 // pred_check
          %p269 = pneg %p214
        $region30: #{tpu_custom_call.1} parent=11 // pred_check_branch
          %271 = sbr.rel (%p269) target = $region32
        $region31: #{tpu_custom_call.1} parent=11 // pred_region
          _
        $region32: #{tpu_custom_call.1} parent=11 // pred_fallthru
          _
      $region12: #{tpu_custom_call.1} parent=5 // pred_fallthru
        _
      %p272 = scmp.lt.s32.totalorder %s17, 2
      // Predicated region
      $region33: #{tpu_custom_call.1} parent=5 // pred_check
        %p273 = pneg %p272
      $region34: #{tpu_custom_call.1} parent=5 // pred_check_branch
        %275 = sbr.rel (%p273) target = $region36
      $region35: #{tpu_custom_call.1} parent=5 // pred_region
        // Predicated region
        $region37: #{tpu_custom_call.1} parent=35 // pred_check
          %p276 = pneg %p51
        $region38: #{tpu_custom_call.1} parent=35 // pred_check_branch
          %278 = sbr.rel (%p276) target = $region40
        $region39: #{tpu_custom_call.1} parent=35 // pred_region
          %s279 = smul.u32 2, %s24
          %p280 = scmp.lt.s32.totalorder %s279, 3
          %s281 = scalar_select %p280, %s279, 3
          %p282 = scmp.lt.s32.totalorder %s25, 0
          %s283 = scalar_select %p282, %s25, 0
          %s284 = sadd.s32 %s283, %s281
          %s285 = smul.addr %s284, 4
          %s286 = scalar_lea.vmem %s0, %s285
          %s287 = smul.u32 2, %s24
        $region40: #{tpu_custom_call.1} parent=35 // pred_fallthru
          _
        // Predicated region
        $region41: #{tpu_custom_call.1} parent=35 // pred_check
          %p288 = pneg %p77
        $region42: #{tpu_custom_call.1} parent=35 // pred_check_branch
          %290 = sbr.rel (%p288) target = $region44
        $region43: #{tpu_custom_call.1} parent=35 // pred_region
          %s291 = smul.u32 2, %s24
          %p292 = scmp.lt.s32.totalorder %s291, 3
          %s293 = scalar_select %p292, %s291, 3
          %s294 = smul.addr %s293, 4
          %s295 = scalar_lea.vmem %s1, %s294
          %s296 = smul.u32 2, %s24
        $region44: #{tpu_custom_call.1} parent=35 // pred_fallthru
          _
        // Predicated region
        $region45: #{tpu_custom_call.1} parent=35 // pred_check
          %p297 = pneg %p103
        $region46: #{tpu_custom_call.1} parent=35 // pred_check_branch
          %299 = sbr.rel (%p297) target = $region48
        $region47: #{tpu_custom_call.1} parent=35 // pred_region
          %s300 = smul.u32 2, %s24
          %p301 = scmp.lt.s32.totalorder %s300, 3
          %s302 = scalar_select %p301, %s300, 3
          %s303 = smul.addr %s302, 4
          %s304 = scalar_lea.vmem %s2, %s303
          %s305 = smul.u32 2, %s24
        $region48: #{tpu_custom_call.1} parent=35 // pred_fallthru
          _
      $region36: #{tpu_custom_call.1} parent=5 // pred_fallthru
        _
      %p306 = scmp.le.s32.totalorder 1, %s17
      %p307 = scmp.lt.s32.totalorder %s17, 3
      %p308 = pnand %p306, %p307
      %p309 = pneg %p308
      // Predicated region
      $region49: #{tpu_custom_call.1} parent=5 // pred_check
        _
      $region50: #{tpu_custom_call.1} parent=5 // pred_check_branch
        %311 = sbr.rel (%p308) target = $region52
      $region51: #{tpu_custom_call.1} parent=5 // pred_region
        %s312 = ssub.s32 %s17, 1
        %s313 = smul.u32 2, %s26
        %p314 = scmp.lt.s32.totalorder %s313, 3
        %s315 = scalar_select %p314, %s313, 3
        %p316 = scmp.lt.s32.totalorder %s27, 0
        %s317 = scalar_select %p316, %s27, 0
        %s318 = sadd.s32 %s317, %s315
        %s319 = smul.addr %s318, 4
        %s320 = scalar_lea.vmem %s0, %s319
        %p321 = pneg %p57
        %p322 = pneg %p54
        %s323 = smul.u32 2, %s26
        %p324 = scmp.lt.s32.totalorder %s323, 3
        %s325 = scalar_select %p324, %s323, 3
        %s326 = smul.addr %s325, 4
        %s327 = scalar_lea.vmem %s1, %s326
        %p328 = pneg %p83
        %p329 = pneg %p80
        %s330 = smul.u32 2, %s26
        %p331 = scmp.lt.s32.totalorder %s330, 3
        %s332 = scalar_select %p331, %s330, 3
        %s333 = smul.addr %s332, 4
        %s334 = scalar_lea.vmem %s2, %s333
        %p335 = pneg %p109
        %p336 = pneg %p106
        %p337 = pneg %p130
        %p338 = pneg %p127
        %p339 = pneg %p151
        %p340 = pneg %p148
        %p341 = pneg %p172
        %p342 = pneg %p169
        %p343 = pneg %p193
        %p344 = pneg %p190
        %p345 = pneg %p214
        %p346 = pneg %p211
        %p347 = pneg %p242
        %p348 = pneg %p239
        %s349 = sand.u32 %s229, 1
        %s350 = scalar_lea.sflag [#allocation3], %s349
        %s351 = sand.u32 %s229, 1
        %s352 = smul.addr %s351, 16
        %s353 = scalar_lea.vmem [#allocation2], %s352
        %s354 = smul.u32 2, %s26
        %p355 = scmp.lt.s32.totalorder %s354, 3
        %s356 = scalar_select %p355, %s354, 3
        %p357 = scmp.lt.s32.totalorder %s27, 0
        %s358 = scalar_select %p357, %s27, 0
        %s359 = sadd.s32 %s358, %s356
        %s360 = smul.addr %s359, 4
        %s361 = scalar_lea.vmem %s0, %s360
        %s362 = smul.u32 2, %s26
        %s363 = smul.u32 2, %s26
        %p364 = scmp.lt.s32.totalorder %s363, 3
        %s365 = scalar_select %p364, %s363, 3
        %s366 = smul.addr %s365, 4
        %s367 = scalar_lea.vmem %s1, %s366
        %s368 = smul.u32 2, %s26
        %s369 = smul.u32 2, %s26
        %p370 = scmp.lt.s32.totalorder %s369, 3
        %s371 = scalar_select %p370, %s369, 3
        %s372 = smul.addr %s371, 4
        %s373 = scalar_lea.vmem %s2, %s372
        %s374 = smul.u32 2, %s26
        %s375 = smul.u32 2, %s26
        %v377 = vld [vmem:[%s3] sm:$0xf]
        %v378 = vld [vmem:[%s3 + $0x4] sm:$0xf]
        %v379 = vld [vmem:[%s3 + $0x8] sm:$0xf]
        %v380 = vld [vmem:[%s3 + $0xc] sm:$0xf]
        %v381 = vld [vmem:[%s3 + $0x10] sm:$0xf]
        %v382 = vld [vmem:[%s3 + $0x14] sm:$0xf]
        %v383 = vld [vmem:[%s3 + $0x18] sm:$0xf]
        %v384 = vld [vmem:[%s3 + $0x1c] sm:$0xf]
        %v385 = vld [vmem:[%s3 + $0x20] sm:$0xf]
        %v386 = vld [vmem:[%s3 + $0x24] sm:$0xf]
        %v387 = vld [vmem:[%s3 + $0x28] sm:$0xf]
        %v388 = vld [vmem:[%s3 + $0x2c] sm:$0xf]
        %v389 = vld [vmem:[%s3 + $0x30] sm:$0xf]
        %v390 = vld [vmem:[%s3 + $0x34] sm:$0xf]
        %v391 = vld [vmem:[%s3 + $0x38] sm:$0xf]
        %v392 = vld [vmem:[%s3 + $0x3c] sm:$0xf]
        %v393 = vld [vmem:[%s4] sm:$0xf]
        %v394 = vld [vmem:[%s4 + $0x4] sm:$0xf]
        %v395 = vld [vmem:[%s4 + $0x8] sm:$0xf]
        %v396 = vld [vmem:[%s4 + $0xc] sm:$0xf]
        %v397 = vld [vmem:[%s4 + $0x10] sm:$0xf]
        %v398 = vld [vmem:[%s4 + $0x14] sm:$0xf]
        %v399 = vld [vmem:[%s4 + $0x18] sm:$0xf]
        %v400 = vld [vmem:[%s4 + $0x1c] sm:$0xf]
        %v401 = vld [vmem:[%s4 + $0x20] sm:$0xf]
        %v402 = vld [vmem:[%s4 + $0x24] sm:$0xf]
        %v403 = vld [vmem:[%s4 + $0x28] sm:$0xf]
        %v404 = vld [vmem:[%s4 + $0x2c] sm:$0xf]
        %v405 = vld [vmem:[%s4 + $0x30] sm:$0xf]
        %v406 = vld [vmem:[%s4 + $0x34] sm:$0xf]
        %v407 = vld [vmem:[%s4 + $0x38] sm:$0xf]
        %v408 = vld [vmem:[%s4 + $0x3c] sm:$0xf]
        %v409 = vld [vmem:[%s5] sm:$0xf]
        %v410 = vld [vmem:[%s5 + $0x4] sm:$0xf]
        %v411 = vld [vmem:[%s5 + $0x8] sm:$0xf]
        %v412 = vld [vmem:[%s5 + $0xc] sm:$0xf]
        %v413 = vld [vmem:[%s5 + $0x10] sm:$0xf]
        %v414 = vld [vmem:[%s5 + $0x14] sm:$0xf]
        %v415 = vld [vmem:[%s5 + $0x18] sm:$0xf]
        %v416 = vld [vmem:[%s5 + $0x1c] sm:$0xf]
        %v417 = vld [vmem:[%s5 + $0x20] sm:$0xf]
        %v418 = vld [vmem:[%s5 + $0x24] sm:$0xf]
        %v419 = vld [vmem:[%s5 + $0x28] sm:$0xf]
        %v420 = vld [vmem:[%s5 + $0x2c] sm:$0xf]
        %v421 = vld [vmem:[%s5 + $0x30] sm:$0xf]
        %v422 = vld [vmem:[%s5 + $0x34] sm:$0xf]
        %v423 = vld [vmem:[%s5 + $0x38] sm:$0xf]
        %v424 = vld [vmem:[%s5 + $0x3c] sm:$0xf]
        %v425 = vld [vmem:[%s6] sm:$0xf]
        %v426 = vld [vmem:[%s7] sm:$0xff]
        %428 = vset.pattern.permute.xlu0 0
        %429 = vperm.xlu0 %428, %v426
        %v430 = vpop.permute.xlu0 %429
        loop: start=0, step=1, limit=2
        $region53: #{tpu_custom_call.1} parent=51 // loop_pre_header
          _
        $region54: #{tpu_custom_call.1} parent=51 // loop_header
          %s433 = sphi 0, %s437
          %p434 = scmp.ge.s32.totalorder %s433, 2
        $region55: #{tpu_custom_call.1} parent=51 // loop_header_branch
          %436 = sbr.rel (%p434) target = $region59
        $region56: #{tpu_custom_call.1} parent=51 // loop_body
          %s438 = smul.addr %s433, 4
          %s439 = scalar_lea.vmem %s361, %s438
          %v440 = vld [vmem:[%s439] sm:$0xf]
          %s441 = smul.addr %s433, 4
          %s442 = scalar_lea.vmem %s367, %s441
          %v443 = vld [vmem:[%s442] sm:$0x7]
          %s444 = smul.addr %s433, 4
          %s445 = scalar_lea.vmem %s373, %s444
          %v446 = vld [vmem:[%s445] sm:$0x7]
          %v463 = vunpack.c.l.b16 %v377
          %v464 = vunpack.c.l.b16 %v378
          %v465 = vunpack.c.l.b16 %v379
          %v466 = vunpack.c.l.b16 %v380
          %v467 = vunpack.c.l.b16 %v381
          %v468 = vunpack.c.l.b16 %v382
          %v469 = vunpack.c.l.b16 %v383
          %v470 = vunpack.c.l.b16 %v384
          %v471 = vunpack.c.l.b16 %v385
          %v472 = vunpack.c.l.b16 %v386
          %v473 = vunpack.c.l.b16 %v387
          %v474 = vunpack.c.l.b16 %v388
          %v475 = vunpack.c.l.b16 %v389
          %v476 = vunpack.c.l.b16 %v390
          %v477 = vunpack.c.l.b16 %v391
          %v478 = vunpack.c.l.b16 %v392
          %v479 = vpack.c.b16 %v464, %v463
          %v480 = vpack.c.b16 %v466, %v465
          %v481 = vpack.c.b16 %v468, %v467
          %v482 = vpack.c.b16 %v470, %v469
          %v483 = vpack.c.b16 %v472, %v471
          %v484 = vpack.c.b16 %v474, %v473
          %v485 = vpack.c.b16 %v476, %v475
          %v486 = vpack.c.b16 %v478, %v477
          %vm487 = vcmask 64512
          %v489 = vsel %vm487, %v479, 0
          %v492 = vsel %vm487, %v480, 0
          %v495 = vsel %vm487, %v481, 0
          %v498 = vsel %vm487, %v482, 0
          %v501 = vsel %vm487, %v483, 0
          %v504 = vsel %vm487, %v484, 0
          %v507 = vsel %vm487, %v485, 0
          %v510 = vsel %vm487, %v486, 0
          %vm512 = vcmask 1043456
          %v514 = vsel %vm512, %v440, 0
          %516 = vmatprep.subr.bf16.mxu0 0
          %517 = vmatpush1.bf16.msra.mxu0 %v514
          %518 = vmatprep.subr.bf16.mxu0 0
          %519 = vmatpush1.bf16.msra.mxu0 0
          %520 = vmatprep.subr.bf16.mxu0 0
          %521 = vmatpush1.bf16.msra.mxu0 0
          %522 = vmatprep.subr.bf16.mxu0 0
          %523 = vmatpush1.bf16.msra.mxu0 0
          %524 = vmatprep.subr.bf16.mxu0 0
          %525 = vmatpush1.bf16.msra.mxu0 0
          %526 = vmatprep.subr.bf16.mxu0 0
          %527 = vmatpush1.bf16.msra.mxu0 0
          %528 = vmatprep.subr.bf16.mxu0 0
          %529 = vmatpush1.bf16.msra.mxu0 0
          %530 = vmatprep.subr.bf16.mxu0 0
          %531 = vmatpush1.bf16.msra.mxu0 0
          %532 = vmatprep.subr.bf16.mxu0 0
          %533 = vmatpush1.bf16.msra.mxu0 0
          %534 = vmatprep.subr.bf16.mxu0 0
          %535 = vmatpush1.bf16.msra.mxu0 0
          %536 = vmatprep.subr.bf16.mxu0 0
          %537 = vmatpush1.bf16.msra.mxu0 0
          %538 = vmatprep.subr.bf16.mxu0 0
          %539 = vmatpush1.bf16.msra.mxu0 0
          %540 = vmatprep.subr.bf16.mxu0 0
          %541 = vmatpush1.bf16.msra.mxu0 0
          %542 = vmatprep.subr.bf16.mxu0 0
          %543 = vmatpush1.bf16.msra.mxu0 0
          %544 = vmatprep.subr.bf16.mxu0 0
          %545 = vmatpush1.bf16.msra.mxu0 0
          %546 = vmatprep.subr.bf16.mxu0 0
          %547 = vmatpush1.bf16.msra.mxu0 0
          %548 = vmatprep.mubr.bf16.mxu0 0
          %549 = vmatmul.mubr.bf16.gmra.mrb[0].mxu0 %v489
          %v550 = vpop.f32.mrb[0].mxu0
          %v551 = vadd.f32 0.0, %v550
          %v552 = vpop.f32.mrb[0].mxu0
          %v553 = vpop.f32.mrb[0].mxu0
          %v554 = vadd.f32 0.0, %v553
          %v555 = vpop.f32.mrb[0].mxu0
          %556 = vmatprep.mubr.bf16.mxu0 0
          %557 = vmatmul.mubr.bf16.gmra.mrb[0].mxu0 %v492
          %v558 = vpop.f32.mrb[0].mxu0
          %v559 = vadd.f32 0.0, %v558
          %v560 = vpop.f32.mrb[0].mxu0
          %v561 = vpop.f32.mrb[0].mxu0
          %v562 = vadd.f32 0.0, %v561
          %v563 = vpop.f32.mrb[0].mxu0
          %564 = vmatprep.mubr.bf16.mxu0 0
          %565 = vmatmul.mubr.bf16.gmra.mrb[0].mxu0 %v495
          %v566 = vpop.f32.mrb[0].mxu0
          %v567 = vadd.f32 0.0, %v566
          %v568 = vpop.f32.mrb[0].mxu0
          %v569 = vpop.f32.mrb[0].mxu0
          %v570 = vadd.f32 0.0, %v569
          %v571 = vpop.f32.mrb[0].mxu0
          %572 = vmatprep.mubr.bf16.mxu0 0
          %573 = vmatmul.mubr.bf16.gmra.mrb[0].mxu0 %v498
          %v574 = vpop.f32.mrb[0].mxu0
          %v575 = vadd.f32 0.0, %v574
          %v576 = vpop.f32.mrb[0].mxu0
          %v577 = vpop.f32.mrb[0].mxu0
          %v578 = vadd.f32 0.0, %v577
          %v579 = vpop.f32.mrb[0].mxu0
          %580 = vmatprep.mubr.bf16.mxu0 0
          %581 = vmatmul.mubr.bf16.gmra.mrb[0].mxu0 %v501
          %v582 = vpop.f32.mrb[0].mxu0
          %v583 = vadd.f32 0.0, %v582
          %v584 = vpop.f32.mrb[0].mxu0
          %v585 = vpop.f32.mrb[0].mxu0
          %v586 = vadd.f32 0.0, %v585
          %v587 = vpop.f32.mrb[0].mxu0
          %588 = vmatprep.mubr.bf16.mxu0 0
          %589 = vmatmul.mubr.bf16.gmra.mrb[0].mxu0 %v504
          %v590 = vpop.f32.mrb[0].mxu0
          %v591 = vadd.f32 0.0, %v590
          %v592 = vpop.f32.mrb[0].mxu0
          %v593 = vpop.f32.mrb[0].mxu0
          %v594 = vadd.f32 0.0, %v593
          %v595 = vpop.f32.mrb[0].mxu0
          %596 = vmatprep.mubr.bf16.mxu0 0
          %597 = vmatmul.mubr.bf16.gmra.mrb[0].mxu0 %v507
          %v598 = vpop.f32.mrb[0].mxu0
          %v599 = vadd.f32 0.0, %v598
          %v600 = vpop.f32.mrb[0].mxu0
          %v601 = vpop.f32.mrb[0].mxu0
          %v602 = vadd.f32 0.0, %v601
          %v603 = vpop.f32.mrb[0].mxu0
          %604 = vmatprep.mubr.bf16.mxu0 0
          %605 = vmatmul.mubr.bf16.gmra.mrb[0].mxu0 %v510
          %v606 = vpop.f32.mrb[0].mxu0
          %v607 = vadd.f32 0.0, %v606
          %v608 = vpop.f32.mrb[0].mxu0
          %v609 = vpop.f32.mrb[0].mxu0
          %v610 = vadd.f32 0.0, %v609
          %v611 = vpop.f32.mrb[0].mxu0
          %612 = vdwg.mxu0
          %v613 = vpack.c.bf16 %v554, %v551
          %v614 = vpack.c.bf16 %v562, %v559
          %v615 = vpack.c.bf16 %v570, %v567
          %v616 = vpack.c.bf16 %v578, %v575
          %v617 = vpack.c.bf16 %v586, %v583
          %v618 = vpack.c.bf16 %v594, %v591
          %v619 = vpack.c.bf16 %v602, %v599
          %v620 = vpack.c.bf16 %v610, %v607
          %v637 = vunpack.c.l.b16 %v393
          %v638 = vunpack.c.l.b16 %v394
          %v639 = vunpack.c.l.b16 %v395
          %v640 = vunpack.c.l.b16 %v396
          %v641 = vunpack.c.l.b16 %v397
          %v642 = vunpack.c.l.b16 %v398
          %v643 = vunpack.c.l.b16 %v399
          %v644 = vunpack.c.l.b16 %v400
          %v645 = vunpack.c.l.b16 %v401
          %v646 = vunpack.c.l.b16 %v402
          %v647 = vunpack.c.l.b16 %v403
          %v648 = vunpack.c.l.b16 %v404
          %v649 = vunpack.c.l.b16 %v405
          %v650 = vunpack.c.l.b16 %v406
          %v651 = vunpack.c.l.b16 %v407
          %v652 = vunpack.c.l.b16 %v408
          %v653 = vpack.c.b16 %v638, %v637
          %v654 = vpack.c.b16 %v640, %v639
          %v655 = vpack.c.b16 %v642, %v641
          %v656 = vpack.c.b16 %v644, %v643
          %v657 = vpack.c.b16 %v646, %v645
          %v658 = vpack.c.b16 %v648, %v647
          %v659 = vpack.c.b16 %v650, %v649
          %v660 = vpack.c.b16 %v652, %v651
          %vm661 = vcmask 48128
          %v663 = vsel %vm661, %v653, 0
          %v666 = vsel %vm661, %v654, 0
          %v669 = vsel %vm661, %v655, 0
          %v672 = vsel %vm661, %v656, 0
          %v675 = vsel %vm661, %v657, 0
          %v678 = vsel %vm661, %v658, 0
          %v681 = vsel %vm661, %v659, 0
          %v684 = vsel %vm661, %v660, 0
          %vm686 = vcmask 1042432
          %v688 = vsel %vm686, %v443, 0
          %690 = vmatprep.subr.bf16.mxu0 0
          %691 = vmatpush1.bf16.msra.mxu0 %v688
          %692 = vmatprep.subr.bf16.mxu0 0
          %693 = vmatpush1.bf16.msra.mxu0 0
          %694 = vmatprep.subr.bf16.mxu0 0
          %695 = vmatpush1.bf16.msra.mxu0 0
          %696 = vmatprep.subr.bf16.mxu0 0
          %697 = vmatpush1.bf16.msra.mxu0 0
          %698 = vmatprep.subr.bf16.mxu0 0
          %699 = vmatpush1.bf16.msra.mxu0 0
          %700 = vmatprep.subr.bf16.mxu0 0
          %701 = vmatpush1.bf16.msra.mxu0 0
          %702 = vmatprep.subr.bf16.mxu0 0
          %703 = vmatpush1.bf16.msra.mxu0 0
          %704 = vmatprep.subr.bf16.mxu0 0
          %705 = vmatpush1.bf16.msra.mxu0 0
          %706 = vmatprep.subr.bf16.mxu0 0
          %707 = vmatpush1.bf16.msra.mxu0 0
          %708 = vmatprep.subr.bf16.mxu0 0
          %709 = vmatpush1.bf16.msra.mxu0 0
          %710 = vmatprep.subr.bf16.mxu0 0
          %711 = vmatpush1.bf16.msra.mxu0 0
          %712 = vmatprep.subr.bf16.mxu0 0
          %713 = vmatpush1.bf16.msra.mxu0 0
          %714 = vmatprep.subr.bf16.mxu0 0
          %715 = vmatpush1.bf16.msra.mxu0 0
          %716 = vmatprep.subr.bf16.mxu0 0
          %717 = vmatpush1.bf16.msra.mxu0 0
          %718 = vmatprep.subr.bf16.mxu0 0
          %719 = vmatpush1.bf16.msra.mxu0 0
          %720 = vmatprep.subr.bf16.mxu0 0
          %721 = vmatpush1.bf16.msra.mxu0 0
          %722 = vmatprep.mubr.bf16.mxu0 0
          %723 = vmatmul.mubr.bf16.gmra.mrb[0].mxu0 %v663
          %v724 = vpop.f32.mrb[0].mxu0
          %v725 = vadd.f32 0.0, %v724
          %v726 = vpop.f32.mrb[0].mxu0
          %v727 = vpop.f32.mrb[0].mxu0
          %v728 = vadd.f32 0.0, %v727
          %v729 = vpop.f32.mrb[0].mxu0
          %730 = vmatprep.mubr.bf16.mxu0 0
          %731 = vmatmul.mubr.bf16.gmra.mrb[0].mxu0 %v666
          %v732 = vpop.f32.mrb[0].mxu0
          %v733 = vadd.f32 0.0, %v732
          %v734 = vpop.f32.mrb[0].mxu0
          %v735 = vpop.f32.mrb[0].mxu0
          %v736 = vadd.f32 0.0, %v735
          %v737 = vpop.f32.mrb[0].mxu0
          %738 = vmatprep.mubr.bf16.mxu0 0
          %739 = vmatmul.mubr.bf16.gmra.mrb[0].mxu0 %v669
          %v740 = vpop.f32.mrb[0].mxu0
          %v741 = vadd.f32 0.0, %v740
          %v742 = vpop.f32.mrb[0].mxu0
          %v743 = vpop.f32.mrb[0].mxu0
          %v744 = vadd.f32 0.0, %v743
          %v745 = vpop.f32.mrb[0].mxu0
          %746 = vmatprep.mubr.bf16.mxu0 0
          %747 = vmatmul.mubr.bf16.gmra.mrb[0].mxu0 %v672
          %v748 = vpop.f32.mrb[0].mxu0
          %v749 = vadd.f32 0.0, %v748
          %v750 = vpop.f32.mrb[0].mxu0
          %v751 = vpop.f32.mrb[0].mxu0
          %v752 = vadd.f32 0.0, %v751
          %v753 = vpop.f32.mrb[0].mxu0
          %754 = vmatprep.mubr.bf16.mxu0 0
          %755 = vmatmul.mubr.bf16.gmra.mrb[0].mxu0 %v675
          %v756 = vpop.f32.mrb[0].mxu0
          %v757 = vadd.f32 0.0, %v756
          %v758 = vpop.f32.mrb[0].mxu0
          %v759 = vpop.f32.mrb[0].mxu0
          %v760 = vadd.f32 0.0, %v759
          %v761 = vpop.f32.mrb[0].mxu0
          %762 = vmatprep.mubr.bf16.mxu0 0
          %763 = vmatmul.mubr.bf16.gmra.mrb[0].mxu0 %v678
          %v764 = vpop.f32.mrb[0].mxu0
          %v765 = vadd.f32 0.0, %v764
          %v766 = vpop.f32.mrb[0].mxu0
          %v767 = vpop.f32.mrb[0].mxu0
          %v768 = vadd.f32 0.0, %v767
          %v769 = vpop.f32.mrb[0].mxu0
          %770 = vmatprep.mubr.bf16.mxu0 0
          %771 = vmatmul.mubr.bf16.gmra.mrb[0].mxu0 %v681
          %v772 = vpop.f32.mrb[0].mxu0
          %v773 = vadd.f32 0.0, %v772
          %v774 = vpop.f32.mrb[0].mxu0
          %v775 = vpop.f32.mrb[0].mxu0
          %v776 = vadd.f32 0.0, %v775
          %v777 = vpop.f32.mrb[0].mxu0
          %778 = vmatprep.mubr.bf16.mxu0 0
          %779 = vmatmul.mubr.bf16.gmra.mrb[0].mxu0 %v684
          %v780 = vpop.f32.mrb[0].mxu0
          %v781 = vadd.f32 0.0, %v780
          %v782 = vpop.f32.mrb[0].mxu0
          %v783 = vpop.f32.mrb[0].mxu0
          %v784 = vadd.f32 0.0, %v783
          %v785 = vpop.f32.mrb[0].mxu0
          %786 = vdwg.mxu0
          %v787 = vpack.c.bf16 %v728, %v725
          %v788 = vpack.c.bf16 %v736, %v733
          %v789 = vpack.c.bf16 %v744, %v741
          %v790 = vpack.c.bf16 %v752, %v749
          %v791 = vpack.c.bf16 %v760, %v757
          %v792 = vpack.c.bf16 %v768, %v765
          %v793 = vpack.c.bf16 %v776, %v773
          %v794 = vpack.c.bf16 %v784, %v781
          %v811 = vunpack.c.l.b16 %v409
          %v812 = vunpack.c.l.b16 %v410
          %v813 = vunpack.c.l.b16 %v411
          %v814 = vunpack.c.l.b16 %v412
          %v815 = vunpack.c.l.b16 %v413
          %v816 = vunpack.c.l.b16 %v414
          %v817 = vunpack.c.l.b16 %v415
          %v818 = vunpack.c.l.b16 %v416
          %v819 = vunpack.c.l.b16 %v417
          %v820 = vunpack.c.l.b16 %v418
          %v821 = vunpack.c.l.b16 %v419
          %v822 = vunpack.c.l.b16 %v420
          %v823 = vunpack.c.l.b16 %v421
          %v824 = vunpack.c.l.b16 %v422
          %v825 = vunpack.c.l.b16 %v423
          %v826 = vunpack.c.l.b16 %v424
          %v827 = vpack.c.b16 %v812, %v811
          %v828 = vpack.c.b16 %v814, %v813
          %v829 = vpack.c.b16 %v816, %v815
          %v830 = vpack.c.b16 %v818, %v817
          %v831 = vpack.c.b16 %v820, %v819
          %v832 = vpack.c.b16 %v822, %v821
          %v833 = vpack.c.b16 %v824, %v823
          %v834 = vpack.c.b16 %v826, %v825
          %v836 = vsel %vm661, %v827, 0
          %v839 = vsel %vm661, %v828, 0
          %v842 = vsel %vm661, %v829, 0
          %v845 = vsel %vm661, %v830, 0
          %v848 = vsel %vm661, %v831, 0
          %v851 = vsel %vm661, %v832, 0
          %v854 = vsel %vm661, %v833, 0
          %v857 = vsel %vm661, %v834, 0
          %v860 = vsel %vm686, %v446, 0
          %862 = vmatprep.subr.bf16.mxu0 0
          %863 = vmatpush1.bf16.msra.mxu0 %v860
          %864 = vmatprep.subr.bf16.mxu0 0
          %865 = vmatpush1.bf16.msra.mxu0 0
          %866 = vmatprep.subr.bf16.mxu0 0
          %867 = vmatpush1.bf16.msra.mxu0 0
          %868 = vmatprep.subr.bf16.mxu0 0
          %869 = vmatpush1.bf16.msra.mxu0 0
          %870 = vmatprep.subr.bf16.mxu0 0
          %871 = vmatpush1.bf16.msra.mxu0 0
          %872 = vmatprep.subr.bf16.mxu0 0
          %873 = vmatpush1.bf16.msra.mxu0 0
          %874 = vmatprep.subr.bf16.mxu0 0
          %875 = vmatpush1.bf16.msra.mxu0 0
          %876 = vmatprep.subr.bf16.mxu0 0
          %877 = vmatpush1.bf16.msra.mxu0 0
          %878 = vmatprep.subr.bf16.mxu0 0
          %879 = vmatpush1.bf16.msra.mxu0 0
          %880 = vmatprep.subr.bf16.mxu0 0
          %881 = vmatpush1.bf16.msra.mxu0 0
          %882 = vmatprep.subr.bf16.mxu0 0
          %883 = vmatpush1.bf16.msra.mxu0 0
          %884 = vmatprep.subr.bf16.mxu0 0
          %885 = vmatpush1.bf16.msra.mxu0 0
          %886 = vmatprep.subr.bf16.mxu0 0
          %887 = vmatpush1.bf16.msra.mxu0 0
          %888 = vmatprep.subr.bf16.mxu0 0
          %889 = vmatpush1.bf16.msra.mxu0 0
          %890 = vmatprep.subr.bf16.mxu0 0
          %891 = vmatpush1.bf16.msra.mxu0 0
          %892 = vmatprep.subr.bf16.mxu0 0
          %893 = vmatpush1.bf16.msra.mxu0 0
          %894 = vmatprep.mubr.bf16.mxu0 0
          %895 = vmatmul.mubr.bf16.gmra.mrb[0].mxu0 %v836
          %v896 = vpop.f32.mrb[0].mxu0
          %v897 = vadd.f32 0.0, %v896
          %v898 = vpop.f32.mrb[0].mxu0
          %v899 = vpop.f32.mrb[0].mxu0
          %v900 = vadd.f32 0.0, %v899
          %v901 = vpop.f32.mrb[0].mxu0
          %902 = vmatprep.mubr.bf16.mxu0 0
          %903 = vmatmul.mubr.bf16.gmra.mrb[0].mxu0 %v839
          %v904 = vpop.f32.mrb[0].mxu0
          %v905 = vadd.f32 0.0, %v904
          %v906 = vpop.f32.mrb[0].mxu0
          %v907 = vpop.f32.mrb[0].mxu0
          %v908 = vadd.f32 0.0, %v907
          %v909 = vpop.f32.mrb[0].mxu0
          %910 = vmatprep.mubr.bf16.mxu0 0
          %911 = vmatmul.mubr.bf16.gmra.mrb[0].mxu0 %v842
          %v912 = vpop.f32.mrb[0].mxu0
          %v913 = vadd.f32 0.0, %v912
          %v914 = vpop.f32.mrb[0].mxu0
          %v915 = vpop.f32.mrb[0].mxu0
          %v916 = vadd.f32 0.0, %v915
          %v917 = vpop.f32.mrb[0].mxu0
          %918 = vmatprep.mubr.bf16.mxu0 0
          %919 = vmatmul.mubr.bf16.gmra.mrb[0].mxu0 %v845
          %v920 = vpop.f32.mrb[0].mxu0
          %v921 = vadd.f32 0.0, %v920
          %v922 = vpop.f32.mrb[0].mxu0
          %v923 = vpop.f32.mrb[0].mxu0
          %v924 = vadd.f32 0.0, %v923
          %v925 = vpop.f32.mrb[0].mxu0
          %926 = vmatprep.mubr.bf16.mxu0 0
          %927 = vmatmul.mubr.bf16.gmra.mrb[0].mxu0 %v848
          %v928 = vpop.f32.mrb[0].mxu0
          %v929 = vadd.f32 0.0, %v928
          %v930 = vpop.f32.mrb[0].mxu0
          %v931 = vpop.f32.mrb[0].mxu0
          %v932 = vadd.f32 0.0, %v931
          %v933 = vpop.f32.mrb[0].mxu0
          %934 = vmatprep.mubr.bf16.mxu0 0
          %935 = vmatmul.mubr.bf16.gmra.mrb[0].mxu0 %v851
          %v936 = vpop.f32.mrb[0].mxu0
          %v937 = vadd.f32 0.0, %v936
          %v938 = vpop.f32.mrb[0].mxu0
          %v939 = vpop.f32.mrb[0].mxu0
          %v940 = vadd.f32 0.0, %v939
          %v941 = vpop.f32.mrb[0].mxu0
          %942 = vmatprep.mubr.bf16.mxu0 0
          %943 = vmatmul.mubr.bf16.gmra.mrb[0].mxu0 %v854
          %v944 = vpop.f32.mrb[0].mxu0
          %v945 = vadd.f32 0.0, %v944
          %v946 = vpop.f32.mrb[0].mxu0
          %v947 = vpop.f32.mrb[0].mxu0
          %v948 = vadd.f32 0.0, %v947
          %v949 = vpop.f32.mrb[0].mxu0
          %950 = vmatprep.mubr.bf16.mxu0 0
          %951 = vmatmul.mubr.bf16.gmra.mrb[0].mxu0 %v857
          %v952 = vpop.f32.mrb[0].mxu0
          %v953 = vadd.f32 0.0, %v952
          %v954 = vpop.f32.mrb[0].mxu0
          %v955 = vpop.f32.mrb[0].mxu0
          %v956 = vadd.f32 0.0, %v955
          %v957 = vpop.f32.mrb[0].mxu0
          %958 = vdwg.mxu0
          %v959 = vpack.c.bf16 %v900, %v897
          %v960 = vpack.c.bf16 %v908, %v905
          %v961 = vpack.c.bf16 %v916, %v913
          %v962 = vpack.c.bf16 %v924, %v921
          %v963 = vpack.c.bf16 %v932, %v929
          %v964 = vpack.c.bf16 %v940, %v937
          %v965 = vpack.c.bf16 %v948, %v945
          %v966 = vpack.c.bf16 %v956, %v953
          %967 = vxpose.xlu0.c.b16.start [1/8] %v613, 128
          %968 = vxpose.xlu0.c.b16.cont [2/8] %v614, 128
          %969 = vxpose.xlu0.c.b16.cont [3/8] 0, 128
          %970 = vxpose.xlu0.c.b16.cont [4/8] 0, 128
          %971 = vxpose.xlu0.c.b16.cont [5/8] 0, 128
          %972 = vxpose.xlu0.c.b16.cont [6/8] 0, 128
          %973 = vxpose.xlu0.c.b16.cont [7/8] 0, 128
          %974 = vxpose.xlu0.c.b16.end [8/8] 0, 128
          %v975 = vpop.trf.xlu0
          %v976 = vpop.trf.xlu0
          %v977 = vpop.trf.xlu0
          %v978 = vpop.trf.xlu0
          %v979 = vpop.trf.xlu0
          %v980 = vpop.trf.xlu0
          %v981 = vpop.trf.xlu0
          %v982 = vpop.trf.xlu0
          %vm983 = vcmask 261120
          %v985 = vsel %vm983, %v975, 0
          %v988 = vsel %vm983, %v976, 0
          %v991 = vsel %vm983, %v977, 0
          %v994 = vsel %vm983, %v978, 0
          %996 = vmatprep.subr.bf16.mxu0 0
          %997 = vmatpush1.bf16.msra.mxu0 %v787
          %998 = vmatprep.subr.bf16.mxu0 0
          %999 = vmatpush1.bf16.msra.mxu0 %v788
          %1000 = vmatprep.subr.bf16.mxu0 0
          %1001 = vmatpush1.bf16.msra.mxu0 0
          %1002 = vmatprep.subr.bf16.mxu0 0
          %1003 = vmatpush1.bf16.msra.mxu0 0
          %1004 = vmatprep.subr.bf16.mxu0 0
          %1005 = vmatpush1.bf16.msra.mxu0 0
          %1006 = vmatprep.subr.bf16.mxu0 0
          %1007 = vmatpush1.bf16.msra.mxu0 0
          %1008 = vmatprep.subr.bf16.mxu0 0
          %1009 = vmatpush1.bf16.msra.mxu0 0
          %1010 = vmatprep.subr.bf16.mxu0 0
          %1011 = vmatpush1.bf16.msra.mxu0 0
          %1012 = vmatprep.subr.bf16.mxu0 0
          %1013 = vmatpush1.bf16.msra.mxu0 0
          %1014 = vmatprep.subr.bf16.mxu0 0
          %1015 = vmatpush1.bf16.msra.mxu0 0
          %1016 = vmatprep.subr.bf16.mxu0 0
          %1017 = vmatpush1.bf16.msra.mxu0 0
          %1018 = vmatprep.subr.bf16.mxu0 0
          %1019 = vmatpush1.bf16.msra.mxu0 0
          %1020 = vmatprep.subr.bf16.mxu0 0
          %1021 = vmatpush1.bf16.msra.mxu0 0
          %1022 = vmatprep.subr.bf16.mxu0 0
          %1023 = vmatpush1.bf16.msra.mxu0 0
          %1024 = vmatprep.subr.bf16.mxu0 0
          %1025 = vmatpush1.bf16.msra.mxu0 0
          %1026 = vmatprep.subr.bf16.mxu0 0
          %1027 = vmatpush1.bf16.msra.mxu0 0
          %1028 = vmatprep.mubr.bf16.mxu0 0
          %1029 = vmatmul.mubr.bf16.gmra.mrb[0].mxu0 %v985
          %v1030 = vpop.f32.mrb[0].mxu0
          %v1031 = vadd.f32 0.0, %v1030
          %v1032 = vpop.f32.mrb[0].mxu0
          %v1033 = vpop.f32.mrb[0].mxu0
          %v1034 = vadd.f32 0.0, %v1033
          %v1035 = vpop.f32.mrb[0].mxu0
          %1036 = vmatprep.mubr.bf16.mxu0 0
          %1037 = vmatmul.mubr.bf16.gmra.mrb[0].mxu0 %v988
          %v1038 = vpop.f32.mrb[0].mxu0
          %v1039 = vadd.f32 0.0, %v1038
          %v1040 = vpop.f32.mrb[0].mxu0
          %v1041 = vpop.f32.mrb[0].mxu0
          %v1042 = vadd.f32 0.0, %v1041
          %v1043 = vpop.f32.mrb[0].mxu0
          %1044 = vmatprep.mubr.bf16.mxu0 0
          %1045 = vmatmul.mubr.bf16.gmra.mrb[0].mxu0 %v991
          %v1046 = vpop.f32.mrb[0].mxu0
          %v1047 = vadd.f32 0.0, %v1046
          %v1048 = vpop.f32.mrb[0].mxu0
          %v1049 = vpop.f32.mrb[0].mxu0
          %v1050 = vadd.f32 0.0, %v1049
          %v1051 = vpop.f32.mrb[0].mxu0
          %1052 = vmatprep.mubr.bf16.mxu0 0
          %1053 = vmatmul.mubr.bf16.gmra.mrb[0].mxu0 %v994
          %v1054 = vpop.f32.mrb[0].mxu0
          %v1055 = vadd.f32 0.0, %v1054
          %v1056 = vpop.f32.mrb[0].mxu0
          %v1057 = vpop.f32.mrb[0].mxu0
          %v1058 = vadd.f32 0.0, %v1057
          %v1059 = vpop.f32.mrb[0].mxu0
          %1060 = vdwg.mxu0
          %vm1061 = vcmask 130048
          %v1062 = vsel %vm1061, %v1031, -inf
          %1063 = vmax.xlane.f32.xlu0 %v1062
          %v1064 = vpop.xlane.xlu0 %1063
          %v1065 = vsel %vm1061, %v1034, -inf
          %1066 = vmax.xlane.f32.xlu0 %v1065
          %v1067 = vpop.xlane.xlu0 %1066
          %v1068 = vsel %vm1061, %v1039, -inf
          %1069 = vmax.xlane.f32.xlu0 %v1068
          %v1070 = vpop.xlane.xlu0 %1069
          %v1071 = vsel %vm1061, %v1042, -inf
          %1072 = vmax.xlane.f32.xlu0 %v1071
          %v1073 = vpop.xlane.xlu0 %1072
          %v1074 = vsel %vm1061, %v1047, -inf
          %1075 = vmax.xlane.f32.xlu0 %v1074
          %v1076 = vpop.xlane.xlu0 %1075
          %v1077 = vsel %vm1061, %v1050, -inf
          %1078 = vmax.xlane.f32.xlu0 %v1077
          %v1079 = vpop.xlane.xlu0 %1078
          %v1080 = vsel %vm1061, %v1055, -inf
          %1081 = vmax.xlane.f32.xlu0 %v1080
          %v1082 = vpop.xlane.xlu0 %1081
          %v1083 = vsel %vm1061, %v1058, -inf
          %1084 = vmax.xlane.f32.xlu0 %v1083
          %v1085 = vpop.xlane.xlu0 %1084
          %v1086 = vsub.f32 %v1031, %v1064
          %v1087 = vsub.f32 %v1034, %v1067
          %v1088 = vsub.f32 %v1039, %v1070
          %v1089 = vsub.f32 %v1042, %v1073
          %v1090 = vsub.f32 %v1047, %v1076
          %v1091 = vsub.f32 %v1050, %v1079
          %v1092 = vsub.f32 %v1055, %v1082
          %v1093 = vsub.f32 %v1058, %v1085
          %v1094 = vmul.f32 %v1086, 1.442695
          %v1095 = vpow.pop %v1094
          %v1096 = vmul.f32 %v1087, 1.442695
          %v1097 = vpow.pop %v1096
          %v1098 = vmul.f32 %v1088, 1.442695
          %v1099 = vpow.pop %v1098
          %v1100 = vmul.f32 %v1089, 1.442695
          %v1101 = vpow.pop %v1100
          %v1102 = vmul.f32 %v1090, 1.442695
          %v1103 = vpow.pop %v1102
          %v1104 = vmul.f32 %v1091, 1.442695
          %v1105 = vpow.pop %v1104
          %v1106 = vmul.f32 %v1092, 1.442695
          %v1107 = vpow.pop %v1106
          %v1108 = vmul.f32 %v1093, 1.442695
          %v1109 = vpow.pop %v1108
          %v1110 = vsel %vm1061, %v1095, 0.0
          %1111 = vadd.xlane.f32.xlu0 %v1110
          %v1112 = vpop.xlane.xlu0 %1111
          %v1113 = vsel %vm1061, %v1097, 0.0
          %1114 = vadd.xlane.f32.xlu0 %v1113
          %v1115 = vpop.xlane.xlu0 %1114
          %v1116 = vsel %vm1061, %v1099, 0.0
          %1117 = vadd.xlane.f32.xlu0 %v1116
          %v1118 = vpop.xlane.xlu0 %1117
          %v1119 = vsel %vm1061, %v1101, 0.0
          %1120 = vadd.xlane.f32.xlu0 %v1119
          %v1121 = vpop.xlane.xlu0 %1120
          %v1122 = vsel %vm1061, %v1103, 0.0
          %1123 = vadd.xlane.f32.xlu0 %v1122
          %v1124 = vpop.xlane.xlu0 %1123
          %v1125 = vsel %vm1061, %v1105, 0.0
          %1126 = vadd.xlane.f32.xlu0 %v1125
          %v1127 = vpop.xlane.xlu0 %1126
          %v1128 = vsel %vm1061, %v1107, 0.0
          %1129 = vadd.xlane.f32.xlu0 %v1128
          %v1130 = vpop.xlane.xlu0 %1129
          %v1131 = vsel %vm1061, %v1109, 0.0
          %1132 = vadd.xlane.f32.xlu0 %v1131
          %v1133 = vpop.xlane.xlu0 %1132
          %v1134 = vrcp.pop %v1112
          %v1135 = vrcp.pop %v1115
          %v1136 = vrcp.pop %v1118
          %v1137 = vrcp.pop %v1121
          %v1138 = vrcp.pop %v1124
          %v1139 = vrcp.pop %v1127
          %v1140 = vrcp.pop %v1130
          %v1141 = vrcp.pop %v1133
          %v1142 = vmul.f32 %v1095, %v1134
          %v1143 = vmul.f32 %v1097, %v1135
          %v1144 = vmul.f32 %v1099, %v1136
          %v1145 = vmul.f32 %v1101, %v1137
          %v1146 = vmul.f32 %v1103, %v1138
          %v1147 = vmul.f32 %v1105, %v1139
          %v1148 = vmul.f32 %v1107, %v1140
          %v1149 = vmul.f32 %v1109, %v1141
          %v1150 = vpack.c.bf16 %v1143, %v1142
          %v1151 = vpack.c.bf16 %v1145, %v1144
          %v1152 = vpack.c.bf16 %v1147, %v1146
          %v1153 = vpack.c.bf16 %v1149, %v1148
          %v1155 = vsel %vm1061, %v959, 0
          %v1158 = vsel %vm1061, %v960, 0
          %v1161 = vsel %vm1061, %v1150, 0
          %v1164 = vsel %vm1061, %v1151, 0
          %v1167 = vsel %vm1061, %v1152, 0
          %v1170 = vsel %vm1061, %v1153, 0
          %1172 = vmatprep.subr.bf16.mxu0 0
          %1173 = vmatpush1.bf16.xpose.msra.mxu0 %v1161
          %1174 = vmatprep.subr.bf16.mxu0 0
          %1175 = vmatpush1.bf16.xpose.msra.mxu0 %v1164
          %1176 = vmatprep.subr.bf16.mxu0 0
          %1177 = vmatpush1.bf16.xpose.msra.mxu0 %v1167
          %1178 = vmatprep.subr.bf16.mxu0 0
          %1179 = vmatpush1.bf16.xpose.msra.mxu0 %v1170
          %1180 = vmatprep.subr.bf16.mxu0 0
          %1181 = vmatpush1.bf16.xpose.msra.mxu0 0
          %1182 = vmatprep.subr.bf16.mxu0 0
          %1183 = vmatpush1.bf16.xpose.msra.mxu0 0
          %1184 = vmatprep.subr.bf16.mxu0 0
          %1185 = vmatpush1.bf16.xpose.msra.mxu0 0
          %1186 = vmatprep.subr.bf16.mxu0 0
          %1187 = vmatpush1.bf16.xpose.msra.mxu0 0
          %1188 = vmatprep.subr.bf16.mxu0 0
          %1189 = vmatpush1.bf16.xpose.msra.mxu0 0
          %1190 = vmatprep.subr.bf16.mxu0 0
          %1191 = vmatpush1.bf16.xpose.msra.mxu0 0
          %1192 = vmatprep.subr.bf16.mxu0 0
          %1193 = vmatpush1.bf16.xpose.msra.mxu0 0
          %1194 = vmatprep.subr.bf16.mxu0 0
          %1195 = vmatpush1.bf16.xpose.msra.mxu0 0
          %1196 = vmatprep.subr.bf16.mxu0 0
          %1197 = vmatpush1.bf16.xpose.msra.mxu0 0
          %1198 = vmatprep.subr.bf16.mxu0 0
          %1199 = vmatpush1.bf16.xpose.msra.mxu0 0
          %1200 = vmatprep.subr.bf16.mxu0 0
          %1201 = vmatpush1.bf16.xpose.msra.mxu0 0
          %1202 = vmatprep.subr.bf16.mxu0 0
          %1203 = vmatpush1.bf16.xpose.msra.mxu0 0
          %1204 = vmatprep.mubr.bf16.mxu0 0
          %1205 = vmatmul.mubr.bf16.gmra.mrb[0].mxu0 %v1155
          %v1206 = vpop.f32.mrb[0].mxu0
          %v1207 = vadd.f32 0.0, %v1206
          %v1208 = vpop.f32.mrb[0].mxu0
          %v1209 = vpop.f32.mrb[0].mxu0
          %v1210 = vadd.f32 0.0, %v1209
          %v1211 = vpop.f32.mrb[0].mxu0
          %1212 = vmatprep.mubr.bf16.mxu0 0
          %1213 = vmatmul.mubr.bf16.gmra.mrb[0].mxu0 %v1158
          %v1214 = vpop.f32.mrb[0].mxu0
          %v1215 = vadd.f32 0.0, %v1214
          %v1216 = vpop.f32.mrb[0].mxu0
          %v1217 = vpop.f32.mrb[0].mxu0
          %v1218 = vadd.f32 0.0, %v1217
          %v1219 = vpop.f32.mrb[0].mxu0
          %1220 = vdwg.mxu0
          %v1221 = vpack.c.bf16 %v1210, %v1207
          %v1222 = vpack.c.bf16 %v1218, %v1215
          %v1224 = vsel %vm983, %v425, 0
          %1226 = vmatprep.subr.bf16.mxu0 0
          %1227 = vmatpush1.bf16.msra.mxu0 %v1221
          %1228 = vmatprep.subr.bf16.mxu0 0
          %1229 = vmatpush1.bf16.msra.mxu0 %v1222
          %1230 = vmatprep.subr.bf16.mxu0 0
          %1231 = vmatpush1.bf16.msra.mxu0 0
          %1232 = vmatprep.subr.bf16.mxu0 0
          %1233 = vmatpush1.bf16.msra.mxu0 0
          %1234 = vmatprep.subr.bf16.mxu0 0
          %1235 = vmatpush1.bf16.msra.mxu0 0
          %1236 = vmatprep.subr.bf16.mxu0 0
          %1237 = vmatpush1.bf16.msra.mxu0 0
          %1238 = vmatprep.subr.bf16.mxu0 0
          %1239 = vmatpush1.bf16.msra.mxu0 0
          %1240 = vmatprep.subr.bf16.mxu0 0
          %1241 = vmatpush1.bf16.msra.mxu0 0
          %1242 = vmatprep.subr.bf16.mxu0 0
          %1243 = vmatpush1.bf16.msra.mxu0 0
          %1244 = vmatprep.subr.bf16.mxu0 0
          %1245 = vmatpush1.bf16.msra.mxu0 0
          %1246 = vmatprep.subr.bf16.mxu0 0
          %1247 = vmatpush1.bf16.msra.mxu0 0
          %1248 = vmatprep.subr.bf16.mxu0 0
          %1249 = vmatpush1.bf16.msra.mxu0 0
          %1250 = vmatprep.subr.bf16.mxu0 0
          %1251 = vmatpush1.bf16.msra.mxu0 0
          %1252 = vmatprep.subr.bf16.mxu0 0
          %1253 = vmatpush1.bf16.msra.mxu0 0
          %1254 = vmatprep.subr.bf16.mxu0 0
          %1255 = vmatpush1.bf16.msra.mxu0 0
          %1256 = vmatprep.subr.bf16.mxu0 0
          %1257 = vmatpush1.bf16.msra.mxu0 0
          %1258 = vmatprep.mubr.bf16.mxu0 0
          %1259 = vmatmul.mubr.bf16.gmra.mrb[0].mxu0 %v1224
          %v1260 = vpop.f32.mrb[0].mxu0
          %v1261 = vadd.f32 0.0, %v1260
          %v1262 = vpop.f32.mrb[0].mxu0
          %v1263 = vpop.f32.mrb[0].mxu0
          %v1264 = vpop.f32.mrb[0].mxu0
          %1265 = vdwg.mxu0
          %v1266 = vadd.f32 %v430, %v1261
          %1267 = vxpose.xlu0.c.b16.start [1/8] %v615, 128
          %1268 = vxpose.xlu0.c.b16.cont [2/8] %v616, 128
          %1269 = vxpose.xlu0.c.b16.cont [3/8] 0, 128
          %1270 = vxpose.xlu0.c.b16.cont [4/8] 0, 128
          %1271 = vxpose.xlu0.c.b16.cont [5/8] 0, 128
          %1272 = vxpose.xlu0.c.b16.cont [6/8] 0, 128
          %1273 = vxpose.xlu0.c.b16.cont [7/8] 0, 128
          %1274 = vxpose.xlu0.c.b16.end [8/8] 0, 128
          %v1275 = vpop.trf.xlu0
          %v1276 = vpop.trf.xlu0
          %v1277 = vpop.trf.xlu0
          %v1278 = vpop.trf.xlu0
          %v1279 = vpop.trf.xlu0
          %v1280 = vpop.trf.xlu0
          %v1281 = vpop.trf.xlu0
          %v1282 = vpop.trf.xlu0
          %v1284 = vsel %vm983, %v1275, 0
          %v1287 = vsel %vm983, %v1276, 0
          %v1290 = vsel %vm983, %v1277, 0
          %v1293 = vsel %vm983, %v1278, 0
          %1295 = vmatprep.subr.bf16.mxu0 0
          %1296 = vmatpush1.bf16.msra.mxu0 %v789
          %1297 = vmatprep.subr.bf16.mxu0 0
          %1298 = vmatpush1.bf16.msra.mxu0 %v790
          %1299 = vmatprep.subr.bf16.mxu0 0
          %1300 = vmatpush1.bf16.msra.mxu0 0
          %1301 = vmatprep.subr.bf16.mxu0 0
          %1302 = vmatpush1.bf16.msra.mxu0 0
          %1303 = vmatprep.subr.bf16.mxu0 0
          %1304 = vmatpush1.bf16.msra.mxu0 0
          %1305 = vmatprep.subr.bf16.mxu0 0
          %1306 = vmatpush1.bf16.msra.mxu0 0
          %1307 = vmatprep.subr.bf16.mxu0 0
          %1308 = vmatpush1.bf16.msra.mxu0 0
          %1309 = vmatprep.subr.bf16.mxu0 0
          %1310 = vmatpush1.bf16.msra.mxu0 0
          %1311 = vmatprep.subr.bf16.mxu0 0
          %1312 = vmatpush1.bf16.msra.mxu0 0
          %1313 = vmatprep.subr.bf16.mxu0 0
          %1314 = vmatpush1.bf16.msra.mxu0 0
          %1315 = vmatprep.subr.bf16.mxu0 0
          %1316 = vmatpush1.bf16.msra.mxu0 0
          %1317 = vmatprep.subr.bf16.mxu0 0
          %1318 = vmatpush1.bf16.msra.mxu0 0
          %1319 = vmatprep.subr.bf16.mxu0 0
          %1320 = vmatpush1.bf16.msra.mxu0 0
          %1321 = vmatprep.subr.bf16.mxu0 0
          %1322 = vmatpush1.bf16.msra.mxu0 0
          %1323 = vmatprep.subr.bf16.mxu0 0
          %1324 = vmatpush1.bf16.msra.mxu0 0
          %1325 = vmatprep.subr.bf16.mxu0 0
          %1326 = vmatpush1.bf16.msra.mxu0 0
          %1327 = vmatprep.mubr.bf16.mxu0 0
          %1328 = vmatmul.mubr.bf16.gmra.mrb[0].mxu0 %v1284
          %v1329 = vpop.f32.mrb[0].mxu0
          %v1330 = vadd.f32 0.0, %v1329
          %v1331 = vpop.f32.mrb[0].mxu0
          %v1332 = vpop.f32.mrb[0].mxu0
          %v1333 = vadd.f32 0.0, %v1332
          %v1334 = vpop.f32.mrb[0].mxu0
          %1335 = vmatprep.mubr.bf16.mxu0 0
          %1336 = vmatmul.mubr.bf16.gmra.mrb[0].mxu0 %v1287
          %v1337 = vpop.f32.mrb[0].mxu0
          %v1338 = vadd.f32 0.0, %v1337
          %v1339 = vpop.f32.mrb[0].mxu0
          %v1340 = vpop.f32.mrb[0].mxu0
          %v1341 = vadd.f32 0.0, %v1340
          %v1342 = vpop.f32.mrb[0].mxu0
          %1343 = vmatprep.mubr.bf16.mxu0 0
          %1344 = vmatmul.mubr.bf16.gmra.mrb[0].mxu0 %v1290
          %v1345 = vpop.f32.mrb[0].mxu0
          %v1346 = vadd.f32 0.0, %v1345
          %v1347 = vpop.f32.mrb[0].mxu0
          %v1348 = vpop.f32.mrb[0].mxu0
          %v1349 = vadd.f32 0.0, %v1348
          %v1350 = vpop.f32.mrb[0].mxu0
          %1351 = vmatprep.mubr.bf16.mxu0 0
          %1352 = vmatmul.mubr.bf16.gmra.mrb[0].mxu0 %v1293
          %v1353 = vpop.f32.mrb[0].mxu0
          %v1354 = vadd.f32 0.0, %v1353
          %v1355 = vpop.f32.mrb[0].mxu0
          %v1356 = vpop.f32.mrb[0].mxu0
          %v1357 = vadd.f32 0.0, %v1356
          %v1358 = vpop.f32.mrb[0].mxu0
          %1359 = vdwg.mxu0
          %v1360 = vsel %vm1061, %v1330, -inf
          %1361 = vmax.xlane.f32.xlu0 %v1360
          %v1362 = vpop.xlane.xlu0 %1361
          %v1363 = vsel %vm1061, %v1333, -inf
          %1364 = vmax.xlane.f32.xlu0 %v1363
          %v1365 = vpop.xlane.xlu0 %1364
          %v1366 = vsel %vm1061, %v1338, -inf
          %1367 = vmax.xlane.f32.xlu0 %v1366
          %v1368 = vpop.xlane.xlu0 %1367
          %v1369 = vsel %vm1061, %v1341, -inf
          %1370 = vmax.xlane.f32.xlu0 %v1369
          %v1371 = vpop.xlane.xlu0 %1370
          %v1372 = vsel %vm1061, %v1346, -inf
          %1373 = vmax.xlane.f32.xlu0 %v1372
          %v1374 = vpop.xlane.xlu0 %1373
          %v1375 = vsel %vm1061, %v1349, -inf
          %1376 = vmax.xlane.f32.xlu0 %v1375
          %v1377 = vpop.xlane.xlu0 %1376
          %v1378 = vsel %vm1061, %v1354, -inf
          %1379 = vmax.xlane.f32.xlu0 %v1378
          %v1380 = vpop.xlane.xlu0 %1379
          %v1381 = vsel %vm1061, %v1357, -inf
          %1382 = vmax.xlane.f32.xlu0 %v1381
          %v1383 = vpop.xlane.xlu0 %1382
          %v1384 = vsub.f32 %v1330, %v1362
          %v1385 = vsub.f32 %v1333, %v1365
          %v1386 = vsub.f32 %v1338, %v1368
          %v1387 = vsub.f32 %v1341, %v1371
          %v1388 = vsub.f32 %v1346, %v1374
          %v1389 = vsub.f32 %v1349, %v1377
          %v1390 = vsub.f32 %v1354, %v1380
          %v1391 = vsub.f32 %v1357, %v1383
          %v1392 = vmul.f32 %v1384, 1.442695
          %v1393 = vpow.pop %v1392
          %v1394 = vmul.f32 %v1385, 1.442695
          %v1395 = vpow.pop %v1394
          %v1396 = vmul.f32 %v1386, 1.442695
          %v1397 = vpow.pop %v1396
          %v1398 = vmul.f32 %v1387, 1.442695
          %v1399 = vpow.pop %v1398
          %v1400 = vmul.f32 %v1388, 1.442695
          %v1401 = vpow.pop %v1400
          %v1402 = vmul.f32 %v1389, 1.442695
          %v1403 = vpow.pop %v1402
          %v1404 = vmul.f32 %v1390, 1.442695
          %v1405 = vpow.pop %v1404
          %v1406 = vmul.f32 %v1391, 1.442695
          %v1407 = vpow.pop %v1406
          %v1408 = vsel %vm1061, %v1393, 0.0
          %1409 = vadd.xlane.f32.xlu0 %v1408
          %v1410 = vpop.xlane.xlu0 %1409
          %v1411 = vsel %vm1061, %v1395, 0.0
          %1412 = vadd.xlane.f32.xlu0 %v1411
          %v1413 = vpop.xlane.xlu0 %1412
          %v1414 = vsel %vm1061, %v1397, 0.0
          %1415 = vadd.xlane.f32.xlu0 %v1414
          %v1416 = vpop.xlane.xlu0 %1415
          %v1417 = vsel %vm1061, %v1399, 0.0
          %1418 = vadd.xlane.f32.xlu0 %v1417
          %v1419 = vpop.xlane.xlu0 %1418
          %v1420 = vsel %vm1061, %v1401, 0.0
          %1421 = vadd.xlane.f32.xlu0 %v1420
          %v1422 = vpop.xlane.xlu0 %1421
          %v1423 = vsel %vm1061, %v1403, 0.0
          %1424 = vadd.xlane.f32.xlu0 %v1423
          %v1425 = vpop.xlane.xlu0 %1424
          %v1426 = vsel %vm1061, %v1405, 0.0
          %1427 = vadd.xlane.f32.xlu0 %v1426
          %v1428 = vpop.xlane.xlu0 %1427
          %v1429 = vsel %vm1061, %v1407, 0.0
          %1430 = vadd.xlane.f32.xlu0 %v1429
          %v1431 = vpop.xlane.xlu0 %1430
          %v1432 = vrcp.pop %v1410
          %v1433 = vrcp.pop %v1413
          %v1434 = vrcp.pop %v1416
          %v1435 = vrcp.pop %v1419
          %v1436 = vrcp.pop %v1422
          %v1437 = vrcp.pop %v1425
          %v1438 = vrcp.pop %v1428
          %v1439 = vrcp.pop %v1431
          %v1440 = vmul.f32 %v1393, %v1432
          %v1441 = vmul.f32 %v1395, %v1433
          %v1442 = vmul.f32 %v1397, %v1434
          %v1443 = vmul.f32 %v1399, %v1435
          %v1444 = vmul.f32 %v1401, %v1436
          %v1445 = vmul.f32 %v1403, %v1437
          %v1446 = vmul.f32 %v1405, %v1438
          %v1447 = vmul.f32 %v1407, %v1439
          %v1448 = vpack.c.bf16 %v1441, %v1440
          %v1449 = vpack.c.bf16 %v1443, %v1442
          %v1450 = vpack.c.bf16 %v1445, %v1444
          %v1451 = vpack.c.bf16 %v1447, %v1446
          %v1453 = vsel %vm1061, %v961, 0
          %v1456 = vsel %vm1061, %v962, 0
          %v1459 = vsel %vm1061, %v1448, 0
          %v1462 = vsel %vm1061, %v1449, 0
          %v1465 = vsel %vm1061, %v1450, 0
          %v1468 = vsel %vm1061, %v1451, 0
          %1470 = vmatprep.subr.bf16.mxu0 0
          %1471 = vmatpush1.bf16.xpose.msra.mxu0 %v1459
          %1472 = vmatprep.subr.bf16.mxu0 0
          %1473 = vmatpush1.bf16.xpose.msra.mxu0 %v1462
          %1474 = vmatprep.subr.bf16.mxu0 0
          %1475 = vmatpush1.bf16.xpose.msra.mxu0 %v1465
          %1476 = vmatprep.subr.bf16.mxu0 0
          %1477 = vmatpush1.bf16.xpose.msra.mxu0 %v1468
          %1478 = vmatprep.subr.bf16.mxu0 0
          %1479 = vmatpush1.bf16.xpose.msra.mxu0 0
          %1480 = vmatprep.subr.bf16.mxu0 0
          %1481 = vmatpush1.bf16.xpose.msra.mxu0 0
          %1482 = vmatprep.subr.bf16.mxu0 0
          %1483 = vmatpush1.bf16.xpose.msra.mxu0 0
          %1484 = vmatprep.subr.bf16.mxu0 0
          %1485 = vmatpush1.bf16.xpose.msra.mxu0 0
          %1486 = vmatprep.subr.bf16.mxu0 0
          %1487 = vmatpush1.bf16.xpose.msra.mxu0 0
          %1488 = vmatprep.subr.bf16.mxu0 0
          %1489 = vmatpush1.bf16.xpose.msra.mxu0 0
          %1490 = vmatprep.subr.bf16.mxu0 0
          %1491 = vmatpush1.bf16.xpose.msra.mxu0 0
          %1492 = vmatprep.subr.bf16.mxu0 0
          %1493 = vmatpush1.bf16.xpose.msra.mxu0 0
          %1494 = vmatprep.subr.bf16.mxu0 0
          %1495 = vmatpush1.bf16.xpose.msra.mxu0 0
          %1496 = vmatprep.subr.bf16.mxu0 0
          %1497 = vmatpush1.bf16.xpose.msra.mxu0 0
          %1498 = vmatprep.subr.bf16.mxu0 0
          %1499 = vmatpush1.bf16.xpose.msra.mxu0 0
          %1500 = vmatprep.subr.bf16.mxu0 0
          %1501 = vmatpush1.bf16.xpose.msra.mxu0 0
          %1502 = vmatprep.mubr.bf16.mxu0 0
          %1503 = vmatmul.mubr.bf16.gmra.mrb[0].mxu0 %v1453
          %v1504 = vpop.f32.mrb[0].mxu0
          %v1505 = vadd.f32 0.0, %v1504
          %v1506 = vpop.f32.mrb[0].mxu0
          %v1507 = vpop.f32.mrb[0].mxu0
          %v1508 = vadd.f32 0.0, %v1507
          %v1509 = vpop.f32.mrb[0].mxu0
          %1510 = vmatprep.mubr.bf16.mxu0 0
          %1511 = vmatmul.mubr.bf16.gmra.mrb[0].mxu0 %v1456
          %v1512 = vpop.f32.mrb[0].mxu0
          %v1513 = vadd.f32 0.0, %v1512
          %v1514 = vpop.f32.mrb[0].mxu0
          %v1515 = vpop.f32.mrb[0].mxu0
          %v1516 = vadd.f32 0.0, %v1515
          %v1517 = vpop.f32.mrb[0].mxu0
          %1518 = vdwg.mxu0
          %v1519 = vpack.c.bf16 %v1508, %v1505
          %v1520 = vpack.c.bf16 %v1516, %v1513
          %v1522 = vunpack.c.l.b16 %v425
          %v1523 = vpack.c.b16 %v1522, %v1522
          %1524 = vrot.lane.b32.xlu0 %v1523, 96
          %v1525 = vpop.permute.xlu0 %1524
          %v1527 = vsel %vm983, %v1525, 0
          %1529 = vmatprep.subr.bf16.mxu0 0
          %1530 = vmatpush1.bf16.msra.mxu0 %v1519
          %1531 = vmatprep.subr.bf16.mxu0 0
          %1532 = vmatpush1.bf16.msra.mxu0 %v1520
          %1533 = vmatprep.subr.bf16.mxu0 0
          %1534 = vmatpush1.bf16.msra.mxu0 0
          %1535 = vmatprep.subr.bf16.mxu0 0
          %1536 = vmatpush1.bf16.msra.mxu0 0
          %1537 = vmatprep.subr.bf16.mxu0 0
          %1538 = vmatpush1.bf16.msra.mxu0 0
          %1539 = vmatprep.subr.bf16.mxu0 0
          %1540 = vmatpush1.bf16.msra.mxu0 0
          %1541 = vmatprep.subr.bf16.mxu0 0
          %1542 = vmatpush1.bf16.msra.mxu0 0
          %1543 = vmatprep.subr.bf16.mxu0 0
          %1544 = vmatpush1.bf16.msra.mxu0 0
          %1545 = vmatprep.subr.bf16.mxu0 0
          %1546 = vmatpush1.bf16.msra.mxu0 0
          %1547 = vmatprep.subr.bf16.mxu0 0
          %1548 = vmatpush1.bf16.msra.mxu0 0
          %1549 = vmatprep.subr.bf16.mxu0 0
          %1550 = vmatpush1.bf16.msra.mxu0 0
          %1551 = vmatprep.subr.bf16.mxu0 0
          %1552 = vmatpush1.bf16.msra.mxu0 0
          %1553 = vmatprep.subr.bf16.mxu0 0
          %1554 = vmatpush1.bf16.msra.mxu0 0
          %1555 = vmatprep.subr.bf16.mxu0 0
          %1556 = vmatpush1.bf16.msra.mxu0 0
          %1557 = vmatprep.subr.bf16.mxu0 0
          %1558 = vmatpush1.bf16.msra.mxu0 0
          %1559 = vmatprep.subr.bf16.mxu0 0
          %1560 = vmatpush1.bf16.msra.mxu0 0
          %1561 = vmatprep.mubr.bf16.mxu0 0
          %1562 = vmatmul.mubr.bf16.gmra.mrb[0].mxu0 %v1527
          %v1563 = vpop.f32.mrb[0].mxu0
          %v1564 = vadd.f32 0.0, %v1563
          %v1565 = vpop.f32.mrb[0].mxu0
          %v1566 = vpop.f32.mrb[0].mxu0
          %v1567 = vpop.f32.mrb[0].mxu0
          %1568 = vdwg.mxu0
          %v1569 = vadd.f32 %v1266, %v1564
          %1570 = vxpose.xlu0.c.b16.start [1/8] %v617, 128
          %1571 = vxpose.xlu0.c.b16.cont [2/8] %v618, 128
          %1572 = vxpose.xlu0.c.b16.cont [3/8] 0, 128
          %1573 = vxpose.xlu0.c.b16.cont [4/8] 0, 128
          %1574 = vxpose.xlu0.c.b16.cont [5/8] 0, 128
          %1575 = vxpose.xlu0.c.b16.cont [6/8] 0, 128
          %1576 = vxpose.xlu0.c.b16.cont [7/8] 0, 128
          %1577 = vxpose.xlu0.c.b16.end [8/8] 0, 128
          %v1578 = vpop.trf.xlu0
          %v1579 = vpop.trf.xlu0
          %v1580 = vpop.trf.xlu0
          %v1581 = vpop.trf.xlu0
          %v1582 = vpop.trf.xlu0
          %v1583 = vpop.trf.xlu0
          %v1584 = vpop.trf.xlu0
          %v1585 = vpop.trf.xlu0
          %v1587 = vsel %vm983, %v1578, 0
          %v1590 = vsel %vm983, %v1579, 0
          %v1593 = vsel %vm983, %v1580, 0
          %v1596 = vsel %vm983, %v1581, 0
          %1598 = vmatprep.subr.bf16.mxu0 0
          %1599 = vmatpush1.bf16.msra.mxu0 %v791
          %1600 = vmatprep.subr.bf16.mxu0 0
          %1601 = vmatpush1.bf16.msra.mxu0 %v792
          %1602 = vmatprep.subr.bf16.mxu0 0
          %1603 = vmatpush1.bf16.msra.mxu0 0
          %1604 = vmatprep.subr.bf16.mxu0 0
          %1605 = vmatpush1.bf16.msra.mxu0 0
          %1606 = vmatprep.subr.bf16.mxu0 0
          %1607 = vmatpush1.bf16.msra.mxu0 0
          %1608 = vmatprep.subr.bf16.mxu0 0
          %1609 = vmatpush1.bf16.msra.mxu0 0
          %1610 = vmatprep.subr.bf16.mxu0 0
          %1611 = vmatpush1.bf16.msra.mxu0 0
          %1612 = vmatprep.subr.bf16.mxu0 0
          %1613 = vmatpush1.bf16.msra.mxu0 0
          %1614 = vmatprep.subr.bf16.mxu0 0
          %1615 = vmatpush1.bf16.msra.mxu0 0
          %1616 = vmatprep.subr.bf16.mxu0 0
          %1617 = vmatpush1.bf16.msra.mxu0 0
          %1618 = vmatprep.subr.bf16.mxu0 0
          %1619 = vmatpush1.bf16.msra.mxu0 0
          %1620 = vmatprep.subr.bf16.mxu0 0
          %1621 = vmatpush1.bf16.msra.mxu0 0
          %1622 = vmatprep.subr.bf16.mxu0 0
          %1623 = vmatpush1.bf16.msra.mxu0 0
          %1624 = vmatprep.subr.bf16.mxu0 0
          %1625 = vmatpush1.bf16.msra.mxu0 0
          %1626 = vmatprep.subr.bf16.mxu0 0
          %1627 = vmatpush1.bf16.msra.mxu0 0
          %1628 = vmatprep.subr.bf16.mxu0 0
          %1629 = vmatpush1.bf16.msra.mxu0 0
          %1630 = vmatprep.mubr.bf16.mxu0 0
          %1631 = vmatmul.mubr.bf16.gmra.mrb[0].mxu0 %v1587
          %v1632 = vpop.f32.mrb[0].mxu0
          %v1633 = vadd.f32 0.0, %v1632
          %v1634 = vpop.f32.mrb[0].mxu0
          %v1635 = vpop.f32.mrb[0].mxu0
          %v1636 = vadd.f32 0.0, %v1635
          %v1637 = vpop.f32.mrb[0].mxu0
          %1638 = vmatprep.mubr.bf16.mxu0 0
          %1639 = vmatmul.mubr.bf16.gmra.mrb[0].mxu0 %v1590
          %v1640 = vpop.f32.mrb[0].mxu0
          %v1641 = vadd.f32 0.0, %v1640
          %v1642 = vpop.f32.mrb[0].mxu0
          %v1643 = vpop.f32.mrb[0].mxu0
          %v1644 = vadd.f32 0.0, %v1643
          %v1645 = vpop.f32.mrb[0].mxu0
          %1646 = vmatprep.mubr.bf16.mxu0 0
          %1647 = vmatmul.mubr.bf16.gmra.mrb[0].mxu0 %v1593
          %v1648 = vpop.f32.mrb[0].mxu0
          %v1649 = vadd.f32 0.0, %v1648
          %v1650 = vpop.f32.mrb[0].mxu0
          %v1651 = vpop.f32.mrb[0].mxu0
          %v1652 = vadd.f32 0.0, %v1651
          %v1653 = vpop.f32.mrb[0].mxu0
          %1654 = vmatprep.mubr.bf16.mxu0 0
          %1655 = vmatmul.mubr.bf16.gmra.mrb[0].mxu0 %v1596
          %v1656 = vpop.f32.mrb[0].mxu0
          %v1657 = vadd.f32 0.0, %v1656
          %v1658 = vpop.f32.mrb[0].mxu0
          %v1659 = vpop.f32.mrb[0].mxu0
          %v1660 = vadd.f32 0.0, %v1659
          %v1661 = vpop.f32.mrb[0].mxu0
          %1662 = vdwg.mxu0
          %v1663 = vsel %vm1061, %v1633, -inf
          %1664 = vmax.xlane.f32.xlu0 %v1663
          %v1665 = vpop.xlane.xlu0 %1664
          %v1666 = vsel %vm1061, %v1636, -inf
          %1667 = vmax.xlane.f32.xlu0 %v1666
          %v1668 = vpop.xlane.xlu0 %1667
          %v1669 = vsel %vm1061, %v1641, -inf
          %1670 = vmax.xlane.f32.xlu0 %v1669
          %v1671 = vpop.xlane.xlu0 %1670
          %v1672 = vsel %vm1061, %v1644, -inf
          %1673 = vmax.xlane.f32.xlu0 %v1672
          %v1674 = vpop.xlane.xlu0 %1673
          %v1675 = vsel %vm1061, %v1649, -inf
          %1676 = vmax.xlane.f32.xlu0 %v1675
          %v1677 = vpop.xlane.xlu0 %1676
          %v1678 = vsel %vm1061, %v1652, -inf
          %1679 = vmax.xlane.f32.xlu0 %v1678
          %v1680 = vpop.xlane.xlu0 %1679
          %v1681 = vsel %vm1061, %v1657, -inf
          %1682 = vmax.xlane.f32.xlu0 %v1681
          %v1683 = vpop.xlane.xlu0 %1682
          %v1684 = vsel %vm1061, %v1660, -inf
          %1685 = vmax.xlane.f32.xlu0 %v1684
          %v1686 = vpop.xlane.xlu0 %1685
          %v1687 = vsub.f32 %v1633, %v1665
          %v1688 = vsub.f32 %v1636, %v1668
          %v1689 = vsub.f32 %v1641, %v1671
          %v1690 = vsub.f32 %v1644, %v1674
          %v1691 = vsub.f32 %v1649, %v1677
          %v1692 = vsub.f32 %v1652, %v1680
          %v1693 = vsub.f32 %v1657, %v1683
          %v1694 = vsub.f32 %v1660, %v1686
          %v1695 = vmul.f32 %v1687, 1.442695
          %v1696 = vpow.pop %v1695
          %v1697 = vmul.f32 %v1688, 1.442695
          %v1698 = vpow.pop %v1697
          %v1699 = vmul.f32 %v1689, 1.442695
          %v1700 = vpow.pop %v1699
          %v1701 = vmul.f32 %v1690, 1.442695
          %v1702 = vpow.pop %v1701
          %v1703 = vmul.f32 %v1691, 1.442695
          %v1704 = vpow.pop %v1703
          %v1705 = vmul.f32 %v1692, 1.442695
          %v1706 = vpow.pop %v1705
          %v1707 = vmul.f32 %v1693, 1.442695
          %v1708 = vpow.pop %v1707
          %v1709 = vmul.f32 %v1694, 1.442695
          %v1710 = vpow.pop %v1709
          %v1711 = vsel %vm1061, %v1696, 0.0
          %1712 = vadd.xlane.f32.xlu0 %v1711
          %v1713 = vpop.xlane.xlu0 %1712
          %v1714 = vsel %vm1061, %v1698, 0.0
          %1715 = vadd.xlane.f32.xlu0 %v1714
          %v1716 = vpop.xlane.xlu0 %1715
          %v1717 = vsel %vm1061, %v1700, 0.0
          %1718 = vadd.xlane.f32.xlu0 %v1717
          %v1719 = vpop.xlane.xlu0 %1718
          %v1720 = vsel %vm1061, %v1702, 0.0
          %1721 = vadd.xlane.f32.xlu0 %v1720
          %v1722 = vpop.xlane.xlu0 %1721
          %v1723 = vsel %vm1061, %v1704, 0.0
          %1724 = vadd.xlane.f32.xlu0 %v1723
          %v1725 = vpop.xlane.xlu0 %1724
          %v1726 = vsel %vm1061, %v1706, 0.0
          %1727 = vadd.xlane.f32.xlu0 %v1726
          %v1728 = vpop.xlane.xlu0 %1727
          %v1729 = vsel %vm1061, %v1708, 0.0
          %1730 = vadd.xlane.f32.xlu0 %v1729
          %v1731 = vpop.xlane.xlu0 %1730
          %v1732 = vsel %vm1061, %v1710, 0.0
          %1733 = vadd.xlane.f32.xlu0 %v1732
          %v1734 = vpop.xlane.xlu0 %1733
          %v1735 = vrcp.pop %v1713
          %v1736 = vrcp.pop %v1716
          %v1737 = vrcp.pop %v1719
          %v1738 = vrcp.pop %v1722
          %v1739 = vrcp.pop %v1725
          %v1740 = vrcp.pop %v1728
          %v1741 = vrcp.pop %v1731
          %v1742 = vrcp.pop %v1734
          %v1743 = vmul.f32 %v1696, %v1735
          %v1744 = vmul.f32 %v1698, %v1736
          %v1745 = vmul.f32 %v1700, %v1737
          %v1746 = vmul.f32 %v1702, %v1738
          %v1747 = vmul.f32 %v1704, %v1739
          %v1748 = vmul.f32 %v1706, %v1740
          %v1749 = vmul.f32 %v1708, %v1741
          %v1750 = vmul.f32 %v1710, %v1742
          %v1751 = vpack.c.bf16 %v1744, %v1743
          %v1752 = vpack.c.bf16 %v1746, %v1745
          %v1753 = vpack.c.bf16 %v1748, %v1747
          %v1754 = vpack.c.bf16 %v1750, %v1749
          %v1756 = vsel %vm1061, %v963, 0
          %v1759 = vsel %vm1061, %v964, 0
          %v1762 = vsel %vm1061, %v1751, 0
          %v1765 = vsel %vm1061, %v1752, 0
          %v1768 = vsel %vm1061, %v1753, 0
          %v1771 = vsel %vm1061, %v1754, 0
          %1773 = vmatprep.subr.bf16.mxu0 0
          %1774 = vmatpush1.bf16.xpose.msra.mxu0 %v1762
          %1775 = vmatprep.subr.bf16.mxu0 0
          %1776 = vmatpush1.bf16.xpose.msra.mxu0 %v1765
          %1777 = vmatprep.subr.bf16.mxu0 0
          %1778 = vmatpush1.bf16.xpose.msra.mxu0 %v1768
          %1779 = vmatprep.subr.bf16.mxu0 0
          %1780 = vmatpush1.bf16.xpose.msra.mxu0 %v1771
          %1781 = vmatprep.subr.bf16.mxu0 0
          %1782 = vmatpush1.bf16.xpose.msra.mxu0 0
          %1783 = vmatprep.subr.bf16.mxu0 0
          %1784 = vmatpush1.bf16.xpose.msra.mxu0 0
          %1785 = vmatprep.subr.bf16.mxu0 0
          %1786 = vmatpush1.bf16.xpose.msra.mxu0 0
          %1787 = vmatprep.subr.bf16.mxu0 0
          %1788 = vmatpush1.bf16.xpose.msra.mxu0 0
          %1789 = vmatprep.subr.bf16.mxu0 0
          %1790 = vmatpush1.bf16.xpose.msra.mxu0 0
          %1791 = vmatprep.subr.bf16.mxu0 0
          %1792 = vmatpush1.bf16.xpose.msra.mxu0 0
          %1793 = vmatprep.subr.bf16.mxu0 0
          %1794 = vmatpush1.bf16.xpose.msra.mxu0 0
          %1795 = vmatprep.subr.bf16.mxu0 0
          %1796 = vmatpush1.bf16.xpose.msra.mxu0 0
          %1797 = vmatprep.subr.bf16.mxu0 0
          %1798 = vmatpush1.bf16.xpose.msra.mxu0 0
          %1799 = vmatprep.subr.bf16.mxu0 0
          %1800 = vmatpush1.bf16.xpose.msra.mxu0 0
          %1801 = vmatprep.subr.bf16.mxu0 0
          %1802 = vmatpush1.bf16.xpose.msra.mxu0 0
          %1803 = vmatprep.subr.bf16.mxu0 0
          %1804 = vmatpush1.bf16.xpose.msra.mxu0 0
          %1805 = vmatprep.mubr.bf16.mxu0 0
          %1806 = vmatmul.mubr.bf16.gmra.mrb[0].mxu0 %v1756
          %v1807 = vpop.f32.mrb[0].mxu0
          %v1808 = vadd.f32 0.0, %v1807
          %v1809 = vpop.f32.mrb[0].mxu0
          %v1810 = vpop.f32.mrb[0].mxu0
          %v1811 = vadd.f32 0.0, %v1810
          %v1812 = vpop.f32.mrb[0].mxu0
          %1813 = vmatprep.mubr.bf16.mxu0 0
          %1814 = vmatmul.mubr.bf16.gmra.mrb[0].mxu0 %v1759
          %v1815 = vpop.f32.mrb[0].mxu0
          %v1816 = vadd.f32 0.0, %v1815
          %v1817 = vpop.f32.mrb[0].mxu0
          %v1818 = vpop.f32.mrb[0].mxu0
          %v1819 = vadd.f32 0.0, %v1818
          %v1820 = vpop.f32.mrb[0].mxu0
          %1821 = vdwg.mxu0
          %v1822 = vpack.c.bf16 %v1811, %v1808
          %v1823 = vpack.c.bf16 %v1819, %v1816
          %1824 = vrot.lane.b32.xlu0 %v1523, 64
          %v1825 = vpop.permute.xlu0 %1824
          %v1827 = vsel %vm983, %v1825, 0
          %1829 = vmatprep.subr.bf16.mxu0 0
          %1830 = vmatpush1.bf16.msra.mxu0 %v1822
          %1831 = vmatprep.subr.bf16.mxu0 0
          %1832 = vmatpush1.bf16.msra.mxu0 %v1823
          %1833 = vmatprep.subr.bf16.mxu0 0
          %1834 = vmatpush1.bf16.msra.mxu0 0
          %1835 = vmatprep.subr.bf16.mxu0 0
          %1836 = vmatpush1.bf16.msra.mxu0 0
          %1837 = vmatprep.subr.bf16.mxu0 0
          %1838 = vmatpush1.bf16.msra.mxu0 0
          %1839 = vmatprep.subr.bf16.mxu0 0
          %1840 = vmatpush1.bf16.msra.mxu0 0
          %1841 = vmatprep.subr.bf16.mxu0 0
          %1842 = vmatpush1.bf16.msra.mxu0 0
          %1843 = vmatprep.subr.bf16.mxu0 0
          %1844 = vmatpush1.bf16.msra.mxu0 0
          %1845 = vmatprep.subr.bf16.mxu0 0
          %1846 = vmatpush1.bf16.msra.mxu0 0
          %1847 = vmatprep.subr.bf16.mxu0 0
          %1848 = vmatpush1.bf16.msra.mxu0 0
          %1849 = vmatprep.subr.bf16.mxu0 0
          %1850 = vmatpush1.bf16.msra.mxu0 0
          %1851 = vmatprep.subr.bf16.mxu0 0
          %1852 = vmatpush1.bf16.msra.mxu0 0
          %1853 = vmatprep.subr.bf16.mxu0 0
          %1854 = vmatpush1.bf16.msra.mxu0 0
          %1855 = vmatprep.subr.bf16.mxu0 0
          %1856 = vmatpush1.bf16.msra.mxu0 0
          %1857 = vmatprep.subr.bf16.mxu0 0
          %1858 = vmatpush1.bf16.msra.mxu0 0
          %1859 = vmatprep.subr.bf16.mxu0 0
          %1860 = vmatpush1.bf16.msra.mxu0 0
          %1861 = vmatprep.mubr.bf16.mxu0 0
          %1862 = vmatmul.mubr.bf16.gmra.mrb[0].mxu0 %v1827
          %v1863 = vpop.f32.mrb[0].mxu0
          %v1864 = vadd.f32 0.0, %v1863
          %v1865 = vpop.f32.mrb[0].mxu0
          %v1866 = vpop.f32.mrb[0].mxu0
          %v1867 = vpop.f32.mrb[0].mxu0
          %1868 = vdwg.mxu0
          %v1869 = vadd.f32 %v1569, %v1864
          %1870 = vxpose.xlu0.c.b16.start [1/8] %v619, 128
          %1871 = vxpose.xlu0.c.b16.cont [2/8] %v620, 128
          %1872 = vxpose.xlu0.c.b16.cont [3/8] 0, 128
          %1873 = vxpose.xlu0.c.b16.cont [4/8] 0, 128
          %1874 = vxpose.xlu0.c.b16.cont [5/8] 0, 128
          %1875 = vxpose.xlu0.c.b16.cont [6/8] 0, 128
          %1876 = vxpose.xlu0.c.b16.cont [7/8] 0, 128
          %1877 = vxpose.xlu0.c.b16.end [8/8] 0, 128
          %v1878 = vpop.trf.xlu0
          %v1879 = vpop.trf.xlu0
          %v1880 = vpop.trf.xlu0
          %v1881 = vpop.trf.xlu0
          %v1882 = vpop.trf.xlu0
          %v1883 = vpop.trf.xlu0
          %v1884 = vpop.trf.xlu0
          %v1885 = vpop.trf.xlu0
          %v1887 = vsel %vm983, %v1878, 0
          %v1890 = vsel %vm983, %v1879, 0
          %v1893 = vsel %vm983, %v1880, 0
          %v1896 = vsel %vm983, %v1881, 0
          %1898 = vmatprep.subr.bf16.mxu0 0
          %1899 = vmatpush1.bf16.msra.mxu0 %v793
          %1900 = vmatprep.subr.bf16.mxu0 0
          %1901 = vmatpush1.bf16.msra.mxu0 %v794
          %1902 = vmatprep.subr.bf16.mxu0 0
          %1903 = vmatpush1.bf16.msra.mxu0 0
          %1904 = vmatprep.subr.bf16.mxu0 0
          %1905 = vmatpush1.bf16.msra.mxu0 0
          %1906 = vmatprep.subr.bf16.mxu0 0
          %1907 = vmatpush1.bf16.msra.mxu0 0
          %1908 = vmatprep.subr.bf16.mxu0 0
          %1909 = vmatpush1.bf16.msra.mxu0 0
          %1910 = vmatprep.subr.bf16.mxu0 0
          %1911 = vmatpush1.bf16.msra.mxu0 0
          %1912 = vmatprep.subr.bf16.mxu0 0
          %1913 = vmatpush1.bf16.msra.mxu0 0
          %1914 = vmatprep.subr.bf16.mxu0 0
          %1915 = vmatpush1.bf16.msra.mxu0 0
          %1916 = vmatprep.subr.bf16.mxu0 0
          %1917 = vmatpush1.bf16.msra.mxu0 0
          %1918 = vmatprep.subr.bf16.mxu0 0
          %1919 = vmatpush1.bf16.msra.mxu0 0
          %1920 = vmatprep.subr.bf16.mxu0 0
          %1921 = vmatpush1.bf16.msra.mxu0 0
          %1922 = vmatprep.subr.bf16.mxu0 0
          %1923 = vmatpush1.bf16.msra.mxu0 0
          %1924 = vmatprep.subr.bf16.mxu0 0
          %1925 = vmatpush1.bf16.msra.mxu0 0
          %1926 = vmatprep.subr.bf16.mxu0 0
          %1927 = vmatpush1.bf16.msra.mxu0 0
          %1928 = vmatprep.subr.bf16.mxu0 0
          %1929 = vmatpush1.bf16.msra.mxu0 0
          %1930 = vmatprep.mubr.bf16.mxu0 0
          %1931 = vmatmul.mubr.bf16.gmra.mrb[0].mxu0 %v1887
          %v1932 = vpop.f32.mrb[0].mxu0
          %v1933 = vadd.f32 0.0, %v1932
          %v1934 = vpop.f32.mrb[0].mxu0
          %v1935 = vpop.f32.mrb[0].mxu0
          %v1936 = vadd.f32 0.0, %v1935
          %v1937 = vpop.f32.mrb[0].mxu0
          %1938 = vmatprep.mubr.bf16.mxu0 0
          %1939 = vmatmul.mubr.bf16.gmra.mrb[0].mxu0 %v1890
          %v1940 = vpop.f32.mrb[0].mxu0
          %v1941 = vadd.f32 0.0, %v1940
          %v1942 = vpop.f32.mrb[0].mxu0
          %v1943 = vpop.f32.mrb[0].mxu0
          %v1944 = vadd.f32 0.0, %v1943
          %v1945 = vpop.f32.mrb[0].mxu0
          %1946 = vmatprep.mubr.bf16.mxu0 0
          %1947 = vmatmul.mubr.bf16.gmra.mrb[0].mxu0 %v1893
          %v1948 = vpop.f32.mrb[0].mxu0
          %v1949 = vadd.f32 0.0, %v1948
          %v1950 = vpop.f32.mrb[0].mxu0
          %v1951 = vpop.f32.mrb[0].mxu0
          %v1952 = vadd.f32 0.0, %v1951
          %v1953 = vpop.f32.mrb[0].mxu0
          %1954 = vmatprep.mubr.bf16.mxu0 0
          %1955 = vmatmul.mubr.bf16.gmra.mrb[0].mxu0 %v1896
          %v1956 = vpop.f32.mrb[0].mxu0
          %v1957 = vadd.f32 0.0, %v1956
          %v1958 = vpop.f32.mrb[0].mxu0
          %v1959 = vpop.f32.mrb[0].mxu0
          %v1960 = vadd.f32 0.0, %v1959
          %v1961 = vpop.f32.mrb[0].mxu0
          %1962 = vdwg.mxu0
          %v1963 = vsel %vm1061, %v1933, -inf
          %1964 = vmax.xlane.f32.xlu0 %v1963
          %v1965 = vpop.xlane.xlu0 %1964
          %v1966 = vsel %vm1061, %v1936, -inf
          %1967 = vmax.xlane.f32.xlu0 %v1966
          %v1968 = vpop.xlane.xlu0 %1967
          %v1969 = vsel %vm1061, %v1941, -inf
          %1970 = vmax.xlane.f32.xlu0 %v1969
          %v1971 = vpop.xlane.xlu0 %1970
          %v1972 = vsel %vm1061, %v1944, -inf
          %1973 = vmax.xlane.f32.xlu0 %v1972
          %v1974 = vpop.xlane.xlu0 %1973
          %v1975 = vsel %vm1061, %v1949, -inf
          %1976 = vmax.xlane.f32.xlu0 %v1975
          %v1977 = vpop.xlane.xlu0 %1976
          %v1978 = vsel %vm1061, %v1952, -inf
          %1979 = vmax.xlane.f32.xlu0 %v1978
          %v1980 = vpop.xlane.xlu0 %1979
          %v1981 = vsel %vm1061, %v1957, -inf
          %1982 = vmax.xlane.f32.xlu0 %v1981
          %v1983 = vpop.xlane.xlu0 %1982
          %v1984 = vsel %vm1061, %v1960, -inf
          %1985 = vmax.xlane.f32.xlu0 %v1984
          %v1986 = vpop.xlane.xlu0 %1985
          %v1987 = vsub.f32 %v1933, %v1965
          %v1988 = vsub.f32 %v1936, %v1968
          %v1989 = vsub.f32 %v1941, %v1971
          %v1990 = vsub.f32 %v1944, %v1974
          %v1991 = vsub.f32 %v1949, %v1977
          %v1992 = vsub.f32 %v1952, %v1980
          %v1993 = vsub.f32 %v1957, %v1983
          %v1994 = vsub.f32 %v1960, %v1986
          %v1995 = vmul.f32 %v1987, 1.442695
          %v1996 = vpow.pop %v1995
          %v1997 = vmul.f32 %v1988, 1.442695
          %v1998 = vpow.pop %v1997
          %v1999 = vmul.f32 %v1989, 1.442695
          %v2000 = vpow.pop %v1999
          %v2001 = vmul.f32 %v1990, 1.442695
          %v2002 = vpow.pop %v2001
          %v2003 = vmul.f32 %v1991, 1.442695
          %v2004 = vpow.pop %v2003
          %v2005 = vmul.f32 %v1992, 1.442695
          %v2006 = vpow.pop %v2005
          %v2007 = vmul.f32 %v1993, 1.442695
          %v2008 = vpow.pop %v2007
          %v2009 = vmul.f32 %v1994, 1.442695
          %v2010 = vpow.pop %v2009
          %v2011 = vsel %vm1061, %v1996, 0.0
          %2012 = vadd.xlane.f32.xlu0 %v2011
          %v2013 = vpop.xlane.xlu0 %2012
          %v2014 = vsel %vm1061, %v1998, 0.0
          %2015 = vadd.xlane.f32.xlu0 %v2014
          %v2016 = vpop.xlane.xlu0 %2015
          %v2017 = vsel %vm1061, %v2000, 0.0
          %2018 = vadd.xlane.f32.xlu0 %v2017
          %v2019 = vpop.xlane.xlu0 %2018
          %v2020 = vsel %vm1061, %v2002, 0.0
          %2021 = vadd.xlane.f32.xlu0 %v2020
          %v2022 = vpop.xlane.xlu0 %2021
          %v2023 = vsel %vm1061, %v2004, 0.0
          %2024 = vadd.xlane.f32.xlu0 %v2023
          %v2025 = vpop.xlane.xlu0 %2024
          %v2026 = vsel %vm1061, %v2006, 0.0
          %2027 = vadd.xlane.f32.xlu0 %v2026
          %v2028 = vpop.xlane.xlu0 %2027
          %v2029 = vsel %vm1061, %v2008, 0.0
          %2030 = vadd.xlane.f32.xlu0 %v2029
          %v2031 = vpop.xlane.xlu0 %2030
          %v2032 = vsel %vm1061, %v2010, 0.0
          %2033 = vadd.xlane.f32.xlu0 %v2032
          %v2034 = vpop.xlane.xlu0 %2033
          %v2035 = vrcp.pop %v2013
          %v2036 = vrcp.pop %v2016
          %v2037 = vrcp.pop %v2019
          %v2038 = vrcp.pop %v2022
          %v2039 = vrcp.pop %v2025
          %v2040 = vrcp.pop %v2028
          %v2041 = vrcp.pop %v2031
          %v2042 = vrcp.pop %v2034
          %v2043 = vmul.f32 %v1996, %v2035
          %v2044 = vmul.f32 %v1998, %v2036
          %v2045 = vmul.f32 %v2000, %v2037
          %v2046 = vmul.f32 %v2002, %v2038
          %v2047 = vmul.f32 %v2004, %v2039
          %v2048 = vmul.f32 %v2006, %v2040
          %v2049 = vmul.f32 %v2008, %v2041
          %v2050 = vmul.f32 %v2010, %v2042
          %v2051 = vpack.c.bf16 %v2044, %v2043
          %v2052 = vpack.c.bf16 %v2046, %v2045
          %v2053 = vpack.c.bf16 %v2048, %v2047
          %v2054 = vpack.c.bf16 %v2050, %v2049
          %v2056 = vsel %vm1061, %v965, 0
          %v2059 = vsel %vm1061, %v966, 0
          %v2062 = vsel %vm1061, %v2051, 0
          %v2065 = vsel %vm1061, %v2052, 0
          %v2068 = vsel %vm1061, %v2053, 0
          %v2071 = vsel %vm1061, %v2054, 0
          %2073 = vmatprep.subr.bf16.mxu0 0
          %2074 = vmatpush1.bf16.xpose.msra.mxu0 %v2062
          %2075 = vmatprep.subr.bf16.mxu0 0
          %2076 = vmatpush1.bf16.xpose.msra.mxu0 %v2065
          %2077 = vmatprep.subr.bf16.mxu0 0
          %2078 = vmatpush1.bf16.xpose.msra.mxu0 %v2068
          %2079 = vmatprep.subr.bf16.mxu0 0
          %2080 = vmatpush1.bf16.xpose.msra.mxu0 %v2071
          %2081 = vmatprep.subr.bf16.mxu0 0
          %2082 = vmatpush1.bf16.xpose.msra.mxu0 0
          %2083 = vmatprep.subr.bf16.mxu0 0
          %2084 = vmatpush1.bf16.xpose.msra.mxu0 0
          %2085 = vmatprep.subr.bf16.mxu0 0
          %2086 = vmatpush1.bf16.xpose.msra.mxu0 0
          %2087 = vmatprep.subr.bf16.mxu0 0
          %2088 = vmatpush1.bf16.xpose.msra.mxu0 0
          %2089 = vmatprep.subr.bf16.mxu0 0
          %2090 = vmatpush1.bf16.xpose.msra.mxu0 0
          %2091 = vmatprep.subr.bf16.mxu0 0
          %2092 = vmatpush1.bf16.xpose.msra.mxu0 0
          %2093 = vmatprep.subr.bf16.mxu0 0
          %2094 = vmatpush1.bf16.xpose.msra.mxu0 0
          %2095 = vmatprep.subr.bf16.mxu0 0
          %2096 = vmatpush1.bf16.xpose.msra.mxu0 0
          %2097 = vmatprep.subr.bf16.mxu0 0
          %2098 = vmatpush1.bf16.xpose.msra.mxu0 0
          %2099 = vmatprep.subr.bf16.mxu0 0
          %2100 = vmatpush1.bf16.xpose.msra.mxu0 0
          %2101 = vmatprep.subr.bf16.mxu0 0
          %2102 = vmatpush1.bf16.xpose.msra.mxu0 0
          %2103 = vmatprep.subr.bf16.mxu0 0
          %2104 = vmatpush1.bf16.xpose.msra.mxu0 0
          %2105 = vmatprep.mubr.bf16.mxu0 0
          %2106 = vmatmul.mubr.bf16.gmra.mrb[0].mxu0 %v2056
          %v2107 = vpop.f32.mrb[0].mxu0
          %v2108 = vadd.f32 0.0, %v2107
          %v2109 = vpop.f32.mrb[0].mxu0
          %v2110 = vpop.f32.mrb[0].mxu0
          %v2111 = vadd.f32 0.0, %v2110
          %v2112 = vpop.f32.mrb[0].mxu0
          %2113 = vmatprep.mubr.bf16.mxu0 0
          %2114 = vmatmul.mubr.bf16.gmra.mrb[0].mxu0 %v2059
          %v2115 = vpop.f32.mrb[0].mxu0
          %v2116 = vadd.f32 0.0, %v2115
          %v2117 = vpop.f32.mrb[0].mxu0
          %v2118 = vpop.f32.mrb[0].mxu0
          %v2119 = vadd.f32 0.0, %v2118
          %v2120 = vpop.f32.mrb[0].mxu0
          %2121 = vdwg.mxu0
          %v2122 = vpack.c.bf16 %v2111, %v2108
          %v2123 = vpack.c.bf16 %v2119, %v2116
          %2124 = vrot.lane.b32.xlu0 %v1523, 32
          %v2125 = vpop.permute.xlu0 %2124
          %v2127 = vsel %vm983, %v2125, 0
          %2129 = vmatprep.subr.bf16.mxu0 0
          %2130 = vmatpush1.bf16.msra.mxu0 %v2122
          %2131 = vmatprep.subr.bf16.mxu0 0
          %2132 = vmatpush1.bf16.msra.mxu0 %v2123
          %2133 = vmatprep.subr.bf16.mxu0 0
          %2134 = vmatpush1.bf16.msra.mxu0 0
          %2135 = vmatprep.subr.bf16.mxu0 0
          %2136 = vmatpush1.bf16.msra.mxu0 0
          %2137 = vmatprep.subr.bf16.mxu0 0
          %2138 = vmatpush1.bf16.msra.mxu0 0
          %2139 = vmatprep.subr.bf16.mxu0 0
          %2140 = vmatpush1.bf16.msra.mxu0 0
          %2141 = vmatprep.subr.bf16.mxu0 0
          %2142 = vmatpush1.bf16.msra.mxu0 0
          %2143 = vmatprep.subr.bf16.mxu0 0
          %2144 = vmatpush1.bf16.msra.mxu0 0
          %2145 = vmatprep.subr.bf16.mxu0 0
          %2146 = vmatpush1.bf16.msra.mxu0 0
          %2147 = vmatprep.subr.bf16.mxu0 0
          %2148 = vmatpush1.bf16.msra.mxu0 0
          %2149 = vmatprep.subr.bf16.mxu0 0
          %2150 = vmatpush1.bf16.msra.mxu0 0
          %2151 = vmatprep.subr.bf16.mxu0 0
          %2152 = vmatpush1.bf16.msra.mxu0 0
          %2153 = vmatprep.subr.bf16.mxu0 0
          %2154 = vmatpush1.bf16.msra.mxu0 0
          %2155 = vmatprep.subr.bf16.mxu0 0
          %2156 = vmatpush1.bf16.msra.mxu0 0
          %2157 = vmatprep.subr.bf16.mxu0 0
          %2158 = vmatpush1.bf16.msra.mxu0 0
          %2159 = vmatprep.subr.bf16.mxu0 0
          %2160 = vmatpush1.bf16.msra.mxu0 0
          %2161 = vmatprep.mubr.bf16.mxu0 0
          %2162 = vmatmul.mubr.bf16.gmra.mrb[0].mxu0 %v2127
          %v2163 = vpop.f32.mrb[0].mxu0
          %v2164 = vadd.f32 0.0, %v2163
          %v2165 = vpop.f32.mrb[0].mxu0
          %v2166 = vpop.f32.mrb[0].mxu0
          %v2167 = vpop.f32.mrb[0].mxu0
          %2168 = vdwg.mxu0
          %v2169 = vadd.f32 %v1869, %v2164
          %s2170 = smul.u32 %s433, 8
          %s2171 = scalar_lea.vmem %s353, %s2170 [#allocation2]
          %vm2172 = vcmask 523264
          %2173 = vst.msk [vmem:[%s2171] sm:$0xff] %vm2172, %v2169
        $region57: #{tpu_custom_call.1} parent=51 // loop_footer
          %s437 = sadd.s32 1, %s433
        $region58: #{tpu_custom_call.1} parent=51 // loop_footer_branch
          %432 = sbr.rel target = $region54
        $region59: #{tpu_custom_call.1} parent=51 // loop_exit
          _
        %s2174 = sand.u32 %s229, 1
        %s2175 = scalar_lea.sflag [#allocation3], %s2174
        %s2176 = sand.u32 %s229, 1
        %s2177 = smul.addr %s2176, 16
        %s2178 = scalar_lea.vmem [#allocation2], %s2177
        // Predicated region
        $region60: #{tpu_custom_call.1} parent=51 // pred_check
          %p2179 = pneg %p239
        $region61: #{tpu_custom_call.1} parent=51 // pred_check_branch
          %2181 = sbr.rel (%p2179) target = $region63
        $region62: #{tpu_custom_call.1} parent=51 // pred_region
          %s2182 = smul.u32 2, %s26
          %s2184 = ssub.s32 256, 256
          %2185 = vsyncadd %s2175, %s2184
          %s2186 = sadd.s32 %s27, %s2182
          %s2187 = smul.addr %s2186, 128
          %s2188 = scalar_lea.hbm %s8, %s2187
          %s2189 = sshll.u32 %s2178, 4
          %s2190 = int_to_ptr.vmem [resolvable:$true] %s2189
          %2195 = dma.vmem_to_hbm [thread:$0]  %s2190, 256, %s2188, %s2175, 128, 128, 8
        $region63: #{tpu_custom_call.1} parent=51 // pred_fallthru
          _
      $region52: #{tpu_custom_call.1} parent=5 // pred_fallthru
        _
      %p2196 = scmp.le.s32.totalorder 2, %s17
      // Predicated region
      $region64: #{tpu_custom_call.1} parent=5 // pred_check
        %p2197 = pneg %p2196
      $region65: #{tpu_custom_call.1} parent=5 // pred_check_branch
        %2199 = sbr.rel (%p2197) target = $region67
      $region66: #{tpu_custom_call.1} parent=5 // pred_region
        %s2200 = ssub.s32 %s17, 2
        // Predicated region
        $region68: #{tpu_custom_call.1} parent=66 // pred_check
          %p2201 = pneg %p245
        $region69: #{tpu_custom_call.1} parent=66 // pred_check_branch
          %2203 = sbr.rel (%p2201) target = $region71
        $region70: #{tpu_custom_call.1} parent=66 // pred_region
          %s2204 = sand.u32 %s230, 1
          %s2205 = scalar_lea.sflag [#allocation3], %s2204
          %s2206 = sand.u32 %s230, 1
          %s2207 = smul.addr %s2206, 16
          %s2208 = scalar_lea.vmem [#allocation2], %s2207
          %2209 = dma.done %s2205, 256
        $region71: #{tpu_custom_call.1} parent=66 // pred_fallthru
          _
      $region67: #{tpu_custom_call.1} parent=5 // pred_fallthru
        _
    $region6: #{tpu_custom_call.1} parent=1 // loop_footer
      %s21 = sadd.s32 1, %s17
    $region7: #{tpu_custom_call.1} parent=1 // loop_footer_branch
      %16 = sbr.rel target = $region3
    $region8: #{tpu_custom_call.1} parent=1 // loop_exit
      _
    %2210 = vsyncpa [#allocation3], 1
    %s2211 = scalar_lea.sflag [#allocation3], 1
    %2212 = vsyncpa %s2211, 1

</llo_original>
